<compile_context>
chip_gen: v7x
topology: tpu7x:2x2x1
jax: 0.10.0
libtpu: 0.0.40
codegen_flags: <defaults>
</compile_context>

<pallas_src>
import functools

import jax
import jax.numpy as jnp
from jax.experimental import pallas as pl
from jax.experimental.pallas import tpu as pltpu

LANE = 128
_NEG_BIG = 1e30  # large finite magnitude: avoids -inf -> NaN for edgeless rows


def _round_up(x, m):
    return ((x + m - 1) // m) * m


def _pad2(x, rows, cols):
    r, c = x.shape
    return jnp.pad(x, ((0, rows - r), (0, cols - c)))


def _tpu_vmem_bytes():
    try:
        return int(pltpu.get_tpu_info().vmem_capacity_bytes)
    except Exception:
        return 64 << 20  # conservative (v7x-sized) fallback


def gat_project_kernel(h_ref, w_ref, a_ref, g_ref, s_ref, *, sum_col):
    """Row-tiled feature projection + fused per-head attention scores.

    h_ref : (T, F_p)     bf16 node features for this row tile (zero padded)
    w_ref : (F_p, HD_p)  bf16 linear.weight^T (zero padded, resident)
    a_ref : (HD_p, S_p)  bf16 [A_l | A_r] block-diag attention weights (resident)
    g_ref : (T, HD_p)    bf16 projected features; lane `sum_col` forced to 1.0
                         so the aggregation matmul yields the softmax
                         denominator for free                    (output)
    s_ref : (T, S_p)     fp32 scores: cols [0,H)=a_l.g, [H,2H)=a_r.g (output)
    """
    g = jnp.dot(h_ref[...], w_ref[...], preferred_element_type=jnp.float32)
    s_ref[...] = jnp.dot(g.astype(jnp.bfloat16), a_ref[...],
                         preferred_element_type=jnp.float32)
    lane = jax.lax.broadcasted_iota(jnp.int32, g.shape, 1)
    g_ref[...] = jnp.where(lane == sum_col, 1.0, g).astype(jnp.bfloat16)


def gat_attn_kernel(sl_ref, st_ref, g_ref, adj_ref, out_ref, *,
                    n_heads, n_hidden, sum_col, neg_slope, apply_elu):
    """One query-row tile of GAT attention (all heads), lane-dense output.

    sl_ref  : (T, S_p)      fp32 scores for this query tile (cols [0,H) = a_l.g)
    st_ref  : (S_p, N_pad)  fp32 transposed scores (rows [H,2H) = a_r.g per node)
    g_ref   : (N_pad, HD_p) bf16 projected features (ones in lane sum_col), resident
    adj_ref : (T, N_pad)    int8 adjacency row tile (0/1)
    out_ref : (T, HD_p)     per-head aggregation, concatenated & zero padded
    """
    sl = sl_ref[...]
    st = st_ref[...]
    g = g_ref[...]
    # Additive adjacency mask computed ONCE per tile from int8 0/1: pure
    # sub+mul (no compare/select), reused across all heads.
    bias = (adj_ref[...].astype(jnp.float32) - 1.0) * _NEG_BIG

    t, out_w = out_ref.shape
    lane = jax.lax.broadcasted_iota(jnp.int32, (t, out_w), 1)
    acc = jnp.zeros((t, out_w), jnp.float32)

    for hd in range(n_heads):  # static, tiny head count -> unrolled
        # e[i, j] = LeakyReLU(sl[i] + sr[j]) + mask   (fp32 elementwise)
        e = sl[:, hd:hd + 1] + st[n_heads + hd:n_heads + hd + 1, :]
        e = jnp.maximum(e, neg_slope * e)            # LeakyReLU as mul+max
        e = e + bias
        # Un-normalized softmax over neighbours j; exponent in bf16 (2x EUP
        # throughput on v6e/v7x, legalized via f32 on v5e), feeding the bf16 MXU.
        m = jnp.max(e, axis=1, keepdims=True)
        p = jnp.exp((e - m).astype(jnp.bfloat16))
        # Aggregate against the FULL lane-padded feature slab: columns of head
        # `hd` hold p_hd @ g[:, hd*D:(hd+1)*D]; lane `sum_col` of g is all-ones
        # so res[:, sum_col] is the softmax denominator (no separate (T, N_pad)
        # sum / cast pass).  Same MXU cost while HD_p stays one lane tile.
        res = jnp.dot(p, g, preferred_element_type=jnp.float32)
        s = res[:, sum_col:sum_col + 1]
        # Deferred softmax normalization on the small (T, HD_p) result; exact
        # reciprocal (it's a (T, 1) vector, essentially free).
        res = res * pl.reciprocal(s)
        head_cols = (lane >= hd * n_hidden) & (lane < (hd + 1) * n_hidden)
        acc = jnp.where(head_cols, res, acc)

    if apply_elu:
        # ELU; exp only of the clamped non-positive branch (no overflow, 0 -> 0
        # keeps padding columns exactly zero).
        acc = jnp.where(acc > 0.0, acc, jnp.exp(jnp.minimum(acc, 0.0)) - 1.0)
    out_ref[...] = acc.astype(out_ref.dtype)


def gat_layer(h_pad, w, a_attn, adj_pad, *, n_heads, n_hidden, is_concat,
              apply_elu, tile_n, out_dtype, vmem_limit_bytes, neg_slope=0.2):
    """One GraphAttentionLayer (two pallas_calls). Returns zero-padded output.

    h_pad   : (N_pad, F_p)  bf16 node features, feature dim padded to 128
    w       : (F_in, n_heads * n_hidden)  == linear.weight.T
    a_attn  : (2 * n_hidden,)             == attn.weight[0] (shared across heads)
    adj_pad : (N_pad, N_pad) int8 0/1, zero padded
    returns : (N_pad, round_up(n_heads * n_hidden + 1, 128)) of `out_dtype`
    """
    N_pad, F_p = h_pad.shape
    F_in, HD = w.shape
    assert HD == n_heads * n_hidden and F_in <= F_p and N_pad % tile_n == 0
    if not is_concat:
        # TODO(synk): multi-head mean (is_concat=False, n_heads>1) not needed by
        # GAT (output layer always uses n_heads=1) and not implemented.
        assert n_heads == 1
    # Reserve at least one spare lane past the head columns for the all-ones
    # "softmax denominator" column.
    HD_p = _round_up(HD + 1, LANE)
    sum_col = HD
    S_p = _round_up(2 * n_heads, 8)

    # Shared attention vector -> block-diagonal per-head matrices, fused so a
    # single MXU matmul yields both the "left" and "right" scores.
    a_l = a_attn[:n_hidden].astype(jnp.float32)
    a_r = a_attn[n_hidden:].astype(jnp.float32)
    eye = jnp.eye(n_heads, dtype=jnp.float32)
    A = jnp.concatenate([jnp.kron(eye, a_l[:, None]),
                         jnp.kron(eye, a_r[:, None])], axis=1)       # (HD, 2H)
    A_pad = _pad2(A, HD_p, S_p).astype(jnp.bfloat16)
    w_pad = _pad2(w.astype(jnp.float32), F_p, HD_p).astype(jnp.bfloat16)
    h_bf = h_pad.astype(jnp.bfloat16)    # no-op when already bf16

    grid_n = N_pad // tile_n

    # --- kernel 1: projection + scores, row-tiled & megacore-parallel --------
    proj = functools.partial(gat_project_kernel, sum_col=sum_col)
    g_bf, scores = pl.pallas_call(
        proj,
        out_shape=(jax.ShapeDtypeStruct((N_pad, HD_p), jnp.bfloat16),
                   jax.ShapeDtypeStruct((N_pad, S_p), jnp.float32)),
        grid=(grid_n,),
        in_specs=[pl.BlockSpec((tile_n, F_p), lambda i: (i, 0)),
                  pl.BlockSpec((F_p, HD_p), lambda i: (0, 0)),   # resident W
                  pl.BlockSpec((HD_p, S_p), lambda i: (0, 0))],  # resident A
        out_specs=(pl.BlockSpec((tile_n, HD_p), lambda i: (i, 0)),
                   pl.BlockSpec((tile_n, S_p), lambda i: (i, 0))),
        compiler_params=pltpu.CompilerParams(
            dimension_semantics=("parallel",),
            vmem_limit_bytes=vmem_limit_bytes),
    )(h_bf, w_pad, A_pad)

    # Tiny (N_pad, S_p) transpose in XLA glue so the kernel can broadcast the
    # neighbour-side scores as sublane rows without an in-kernel transpose.
    scores_t = jnp.transpose(scores)                                 # (S_p, N_pad)

    # --- kernel 2: attention + aggregation, tiled over query-node rows -------
    kernel = functools.partial(
        gat_attn_kernel, n_heads=n_heads, n_hidden=n_hidden, sum_col=sum_col,
        neg_slope=neg_slope, apply_elu=apply_elu)

    out_pad = pl.pallas_call(
        kernel,
        out_shape=jax.ShapeDtypeStruct((N_pad, HD_p), out_dtype),
        grid=(grid_n,),
        in_specs=[
            pl.BlockSpec((tile_n, S_p), lambda i: (i, 0)),    # query-tile scores
            pl.BlockSpec((S_p, N_pad), lambda i: (0, 0)),     # resident scores^T
            pl.BlockSpec((N_pad, HD_p), lambda i: (0, 0)),    # resident g (bf16)
            # int8 adjacency row tile: the dominant O(N^2) HBM stream.
            # TODO(synk): on v5e, add pipeline_mode=pl.Buffered(3) here if a
            # profile shows the adjacency DMA exposed.
            pl.BlockSpec((tile_n, N_pad), lambda i: (i, 0)),
        ],
        out_specs=pl.BlockSpec((tile_n, HD_p), lambda i: (i, 0)),
        compiler_params=pltpu.CompilerParams(
            dimension_semantics=("parallel",),
            vmem_limit_bytes=vmem_limit_bytes),
    )(scores, scores_t, g_bf, adj_pad)

    return out_pad


def gat_forward(x, adj_mat, params, *, n_heads, n_hidden, n_classes, tile_n=None):
    """Full GAT forward (dropout = identity / inference mode)."""
    # x: (1, in_features, n_nodes) -> node-major (n_nodes, in_features)
    h = jnp.transpose(x[0], (1, 0)).astype(jnp.float32)
    N, F_in = h.shape

    vmem = _tpu_vmem_bytes()
    big_vmem = vmem >= (100 << 20)        # v5e/v6e (128 MiB) vs v7x (64 MiB)
    if tile_n is None:
        # Bigger row tiles amortize per-grid-step overhead; cap at 128 on v7x
        # since the unrolled head loop keeps several (T, N_pad) fp32 temps live.
        tile_n = min(256 if big_vmem else 128, _round_up(N, 32))
    tile_n = _round_up(tile_n, 32)        # int8 adjacency tiles: 32-sublane aligned
    N_pad = _round_up(N, tile_n)
    vmem_limit = (96 << 20) if big_vmem else (32 << 20)

    # adj_mat (N, N, 1) -> int8 0/1 (quarters the adjacency DMA vs fp32), zero
    # padded; padded rows/cols are masked inside the kernel (finite -1e30 bias).
    adj = (adj_mat[:, :, 0] != 0).astype(jnp.int8)
    adj_pad = _pad2(adj, N_pad, N_pad)

    hid = n_hidden // n_heads
    # Node features shipped as bf16 (the MXU input dtype) straight from the glue.
    h_pad = _pad2(h, N_pad, _round_up(F_in, LANE)).astype(jnp.bfloat16)

    # layer1: multi-head, concat=True; GAT.forward's ELU fused into the kernel.
    # Output stays bf16 (halves the inter-layer HBM traffic) because layer-2's
    # projection consumes it as bf16 anyway.
    h1_pad = gat_layer(h_pad, params["w1"], params["a1"], adj_pad,
                       n_heads=n_heads, n_hidden=hid, is_concat=True,
                       apply_elu=True, tile_n=tile_n, out_dtype=jnp.bfloat16,
                       vmem_limit_bytes=vmem_limit)
    # layer1's zero-padded output doubles as layer2's padded input.
    out_pad = gat_layer(h1_pad, params["w2"], params["a2"], adj_pad,
                        n_heads=1, n_hidden=n_classes, is_concat=False,
                        apply_elu=False, tile_n=tile_n, out_dtype=jnp.float32,
                        vmem_limit_bytes=vmem_limit)
    return out_pad[:N, :n_classes]


if __name__ == "__main__":
    # Small, module-consistent shapes (TILE_N=32 -> attention grid of 3 tiles).
    N_NODES = 48
    IN_FEATURES = 16
    N_HIDDEN = 32        # layer1 out_features (divisible by n_heads)
    N_HEADS = 4
    N_CLASSES = 8
    TILE_N = 32

    key = jax.random.PRNGKey(0)
    k_x, k_adj, k_w1, k_a1, k_w2, k_a2 = jax.random.split(key, 6)

    # Input in the PyTorch layout: (batch=1, in_features, n_nodes)
    x = jax.random.normal(k_x, (1, IN_FEATURES, N_NODES), jnp.float32)

    # Random adjacency with self-loops so every softmax row has >= 1 edge.
    adj = (jax.random.uniform(k_adj, (N_NODES, N_NODES)) < 0.3).astype(jnp.float32)
    adj = jnp.maximum(adj, jnp.eye(N_NODES, dtype=jnp.float32))
    adj_mat = adj[:, :, None]                                 # (N, N, 1)

    hid = N_HIDDEN // N_HEADS
    # Synthetic parameters (shapes match the nn.Module __init__):
    #   layer1.linear.weight : (n_heads*hid, in_features)  -> stored transposed
    #   layer1.attn.weight   : (1, 2*hid)
    #   output.linear.weight : (n_classes, n_hidden)        -> stored transposed
    #   output.attn.weight   : (1, 2*n_classes)
    params = {
        "w1": 0.1 * jax.random.normal(k_w1, (IN_FEATURES, N_HEADS * hid), jnp.float32),
        "a1": 0.1 * jax.random.normal(k_a1, (2 * hid,), jnp.float32),
        "w2": 0.1 * jax.random.normal(k_w2, (N_HIDDEN, N_CLASSES), jnp.float32),
        "a2": 0.1 * jax.random.normal(k_a2, (2 * N_CLASSES,), jnp.float32),
    }

    fwd = jax.jit(functools.partial(gat_forward, n_heads=N_HEADS,
                                    n_hidden=N_HIDDEN, n_classes=N_CLASSES,
                                    tile_n=TILE_N))
    out = jax.block_until_ready(fwd(x, adj_mat, params))

    assert out.shape == (N_NODES, N_CLASSES), out.shape
    assert bool(jnp.all(jnp.isfinite(out)))
    print("KERNEL_OK")
</pallas_src>

<mosaic_0001>
module attributes {stable_mosaic.version = 11 : i64} {
  func.func @gat_project_kernel(%arg0: i32, %arg1: memref<32x128xbf16, #tpu.memory_space<vmem>>, %arg2: memref<128x128xbf16, #tpu.memory_space<vmem>>, %arg3: memref<128x8xbf16, #tpu.memory_space<vmem>>, %arg4: memref<32x128xbf16, #tpu.memory_space<vmem>>, %arg5: memref<32x8xf32, #tpu.memory_space<vmem>>) attributes {dimension_semantics = [#tpu.dimension_semantics<parallel>], iteration_bounds = array<i64: 2>, scalar_prefetch = 0 : i64, scratch_operands = 0 : i64, tpu.core_type = #tpu.core_type<tc>, window_params = [{transform_indices = @transform_0, window_bounds = array<i64: 32, 128>}, {pipeline_mode = #tpu.pipeline_mode<synchronous>, transform_indices = @transform_1, window_bounds = array<i64: 128, 128>}, {pipeline_mode = #tpu.pipeline_mode<synchronous>, transform_indices = @transform_2, window_bounds = array<i64: 128, 8>}, {transform_indices = @transform_3, window_bounds = array<i64: 32, 128>}, {transform_indices = @transform_4, window_bounds = array<i64: 32, 8>}]} {
    %c0 = arith.constant 0 : index
    %c0_0 = arith.constant 0 : index
    %0 = vector.load %arg1[%c0, %c0_0] : memref<32x128xbf16, #tpu.memory_space<vmem>>, vector<32x128xbf16>
    %c0_1 = arith.constant 0 : index
    %c0_2 = arith.constant 0 : index
    %1 = vector.load %arg2[%c0_1, %c0_2] : memref<128x128xbf16, #tpu.memory_space<vmem>>, vector<128x128xbf16>
    %cst = arith.constant dense<0.000000e+00> : vector<32x128xf32>
    %2 = tpu.matmul %0, %1, %cst {dimension_numbers = #tpu.dot_dimension_numbers<[1], [0], [0], [1], [0, 0, 1, 1], [], []>} : vector<32x128xbf16>, vector<128x128xbf16>, vector<32x128xf32> -> vector<32x128xf32>
    %3 = arith.truncf %2 : vector<32x128xf32> to vector<32x128xbf16>
    %c0_3 = arith.constant 0 : index
    %c0_4 = arith.constant 0 : index
    %4 = vector.load %arg3[%c0_3, %c0_4] : memref<128x8xbf16, #tpu.memory_space<vmem>>, vector<128x8xbf16>
    %cst_5 = arith.constant dense<0.000000e+00> : vector<32x8xf32>
    %5 = tpu.matmul %3, %4, %cst_5 {dimension_numbers = #tpu.dot_dimension_numbers<[1], [0], [0], [1], [0, 0, 1, 1], [], []>} : vector<32x128xbf16>, vector<128x8xbf16>, vector<32x8xf32> -> vector<32x8xf32>
    %c0_6 = arith.constant 0 : index
    %c0_7 = arith.constant 0 : index
    %6 = vector.load %arg5[%c0_6, %c0_7] : memref<32x8xf32, #tpu.memory_space<vmem>>, vector<32x8xf32>
    tpu.vector_store %arg5[%c0_6, %c0_7], %5 {strides = array<i32>} : memref<32x8xf32, #tpu.memory_space<vmem>>, vector<32x8xf32>,
    %7 = tpu.iota {dimensions = array<i32: 1>} : vector<32x128xi32>
    %c32_i32 = arith.constant 32 : i32
    %8 = vector.broadcast %c32_i32 : i32 to vector<32x128xi32>
    %9 = arith.cmpi eq, %7, %8 : vector<32x128xi32>
    %cst_8 = arith.constant 1.000000e+00 : f32
    %10 = vector.broadcast %cst_8 : f32 to vector<32x128xf32>
    %11 = arith.select %9, %10, %2 : vector<32x128xi1>, vector<32x128xf32>
    %12 = arith.truncf %11 : vector<32x128xf32> to vector<32x128xbf16>
    %c0_9 = arith.constant 0 : index
    %c0_10 = arith.constant 0 : index
    %13 = vector.load %arg4[%c0_9, %c0_10] : memref<32x128xbf16, #tpu.memory_space<vmem>>, vector<32x128xbf16>
    tpu.vector_store %arg4[%c0_9, %c0_10], %12 {strides = array<i32>} : memref<32x128xbf16, #tpu.memory_space<vmem>>, vector<32x128xbf16>,
    return
  }
  func.func @transform_0(%arg0: i32) -> (i32, i32) {
    %c0_i32 = arith.constant 0 : i32
    %c0_i32_0 = arith.constant 0 : i32
    return %arg0, %c0_i32 : i32, i32
  }
  func.func @transform_1(%arg0: i32) -> (i32, i32) {
    %c0_i32 = arith.constant 0 : i32
    %c0_i32_0 = arith.constant 0 : i32
    %c0_i32_1 = arith.constant 0 : i32
    return %c0_i32, %c0_i32_0 : i32, i32
  }
  func.func @transform_2(%arg0: i32) -> (i32, i32) {
    %c0_i32 = arith.constant 0 : i32
    %c0_i32_0 = arith.constant 0 : i32
    %c0_i32_1 = arith.constant 0 : i32
    return %c0_i32, %c0_i32_0 : i32, i32
  }
  func.func @transform_3(%arg0: i32) -> (i32, i32) {
    %c0_i32 = arith.constant 0 : i32
    %c0_i32_0 = arith.constant 0 : i32
    return %arg0, %c0_i32 : i32, i32
  }
  func.func @transform_4(%arg0: i32) -> (i32, i32) {
    %c0_i32 = arith.constant 0 : i32
    %c0_i32_0 = arith.constant 0 : i32
    return %arg0, %c0_i32 : i32, i32
  }
}

module attributes {stable_mosaic.version = 11 : i64} {
  func.func @gat_attn_kernel(%arg0: i32, %arg1: memref<32x8xf32, #tpu.memory_space<vmem>>, %arg2: memref<8x64xf32, #tpu.memory_space<vmem>>, %arg3: memref<64x128xbf16, #tpu.memory_space<vmem>>, %arg4: memref<32x64xi8, #tpu.memory_space<vmem>>, %arg5: memref<32x128xbf16, #tpu.memory_space<vmem>>) attributes {dimension_semantics = [#tpu.dimension_semantics<parallel>], iteration_bounds = array<i64: 2>, scalar_prefetch = 0 : i64, scratch_operands = 0 : i64, tpu.core_type = #tpu.core_type<tc>, window_params = [{transform_indices = @transform_0, window_bounds = array<i64: 32, 8>}, {pipeline_mode = #tpu.pipeline_mode<synchronous>, transform_indices = @transform_1, window_bounds = array<i64: 8, 64>}, {pipeline_mode = #tpu.pipeline_mode<synchronous>, transform_indices = @transform_2, window_bounds = array<i64: 64, 128>}, {transform_indices = @transform_3, window_bounds = array<i64: 32, 64>}, {transform_indices = @transform_4, window_bounds = array<i64: 32, 128>}]} {
    %c0 = arith.constant 0 : index
    %c0_0 = arith.constant 0 : index
    %0 = vector.load %arg1[%c0, %c0_0] : memref<32x8xf32, #tpu.memory_space<vmem>>, vector<32x8xf32>
    %c0_1 = arith.constant 0 : index
    %c0_2 = arith.constant 0 : index
    %1 = vector.load %arg2[%c0_1, %c0_2] : memref<8x64xf32, #tpu.memory_space<vmem>>, vector<8x64xf32>
    %c0_3 = arith.constant 0 : index
    %c0_4 = arith.constant 0 : index
    %2 = vector.load %arg3[%c0_3, %c0_4] : memref<64x128xbf16, #tpu.memory_space<vmem>>, vector<64x128xbf16>
    %c0_5 = arith.constant 0 : index
    %c0_6 = arith.constant 0 : index
    %3 = vector.load %arg4[%c0_5, %c0_6] : memref<32x64xi8, #tpu.memory_space<vmem>>, vector<32x64xi8>
    %4 = arith.sitofp %3 : vector<32x64xi8> to vector<32x64xf32>
    %cst = arith.constant 1.000000e+00 : f32
    %5 = vector.broadcast %cst : f32 to vector<32x64xf32>
    %6 = arith.subf %4, %5 : vector<32x64xf32>
    %cst_7 = arith.constant 1.000000e+30 : f32
    %7 = vector.broadcast %cst_7 : f32 to vector<32x64xf32>
    %8 = arith.mulf %6, %7 : vector<32x64xf32>
    %9 = tpu.iota {dimensions = array<i32: 1>} : vector<32x128xi32>
    %cst_8 = arith.constant 0.000000e+00 : f32
    %10 = vector.broadcast %cst_8 : f32 to vector<32x128xf32>
    %11 = vector.extract_strided_slice %0 {offsets = [0, 0], sizes = [32, 1], strides = [1, 1]} : vector<32x8xf32> to vector<32x1xf32>
    %12 = vector.extract_strided_slice %1 {offsets = [4, 0], sizes = [1, 64], strides = [1, 1]} : vector<8x64xf32> to vector<1x64xf32>
    %13 = vector.broadcast %11 : vector<32x1xf32> to vector<32x64xf32>
    %14 = vector.broadcast %12 : vector<1x64xf32> to vector<32x64xf32>
    %15 = arith.addf %13, %14 : vector<32x64xf32>
    %cst_9 = arith.constant 2.000000e-01 : f32
    %16 = vector.broadcast %cst_9 : f32 to vector<32x64xf32>
    %17 = arith.mulf %16, %15 : vector<32x64xf32>
    %18 = arith.maximumf %15, %17 : vector<32x64xf32>
    %19 = arith.addf %18, %8 : vector<32x64xf32>
    %cst_10 = arith.constant dense<0xFF800000> : vector<32xf32>
    %20 = vector.multi_reduction <maximumf>, %19, %cst_10 [1] : vector<32x64xf32> to vector<32xf32>
    %21 = vector.shape_cast %20 : vector<32xf32> to vector<32x1xf32>
    %22 = vector.broadcast %21 : vector<32x1xf32> to vector<32x64xf32>
    %23 = arith.subf %19, %22 : vector<32x64xf32>
    %24 = arith.truncf %23 : vector<32x64xf32> to vector<32x64xbf16>
    %25 = math.exp %24 : vector<32x64xbf16>
    %cst_11 = arith.constant dense<0.000000e+00> : vector<32x128xf32>
    %26 = tpu.matmul %25, %2, %cst_11 {dimension_numbers = #tpu.dot_dimension_numbers<[1], [0], [0], [1], [0, 0, 1, 1], [], []>} : vector<32x64xbf16>, vector<64x128xbf16>, vector<32x128xf32> -> vector<32x128xf32>
    %27 = vector.extract_strided_slice %26 {offsets = [0, 32], sizes = [32, 1], strides = [1, 1]} : vector<32x128xf32> to vector<32x1xf32>
    %28 = tpu.reciprocal %27 : vector<32x1xf32> -> vector<32x1xf32>
    %29 = vector.broadcast %28 : vector<32x1xf32> to vector<32x128xf32>
    %30 = arith.mulf %26, %29 : vector<32x128xf32>
    %c0_i32 = arith.constant 0 : i32
    %31 = vector.broadcast %c0_i32 : i32 to vector<32x128xi32>
    %32 = arith.cmpi sge, %9, %31 : vector<32x128xi32>
    %c8_i32 = arith.constant 8 : i32
    %33 = vector.broadcast %c8_i32 : i32 to vector<32x128xi32>
    %34 = arith.cmpi slt, %9, %33 : vector<32x128xi32>
    %35 = arith.andi %32, %34 : vector<32x128xi1>
    %36 = arith.select %35, %30, %10 : vector<32x128xi1>, vector<32x128xf32>
    %37 = vector.extract_strided_slice %0 {offsets = [0, 1], sizes = [32, 1], strides = [1, 1]} : vector<32x8xf32> to vector<32x1xf32>
    %38 = vector.extract_strided_slice %1 {offsets = [5, 0], sizes = [1, 64], strides = [1, 1]} : vector<8x64xf32> to vector<1x64xf32>
    %39 = vector.broadcast %37 : vector<32x1xf32> to vector<32x64xf32>
    %40 = vector.broadcast %38 : vector<1x64xf32> to vector<32x64xf32>
    %41 = arith.addf %39, %40 : vector<32x64xf32>
    %cst_12 = arith.constant 2.000000e-01 : f32
    %42 = vector.broadcast %cst_12 : f32 to vector<32x64xf32>
    %43 = arith.mulf %42, %41 : vector<32x64xf32>
    %44 = arith.maximumf %41, %43 : vector<32x64xf32>
    %45 = arith.addf %44, %8 : vector<32x64xf32>
    %cst_13 = arith.constant dense<0xFF800000> : vector<32xf32>
    %46 = vector.multi_reduction <maximumf>, %45, %cst_13 [1] : vector<32x64xf32> to vector<32xf32>
    %47 = vector.shape_cast %46 : vector<32xf32> to vector<32x1xf32>
    %48 = vector.broadcast %47 : vector<32x1xf32> to vector<32x64xf32>
    %49 = arith.subf %45, %48 : vector<32x64xf32>
    %50 = arith.truncf %49 : vector<32x64xf32> to vector<32x64xbf16>
    %51 = math.exp %50 : vector<32x64xbf16>
    %cst_14 = arith.constant dense<0.000000e+00> : vector<32x128xf32>
    %52 = tpu.matmul %51, %2, %cst_14 {dimension_numbers = #tpu.dot_dimension_numbers<[1], [0], [0], [1], [0, 0, 1, 1], [], []>} : vector<32x64xbf16>, vector<64x128xbf16>, vector<32x128xf32> -> vector<32x128xf32>
    %53 = vector.extract_strided_slice %52 {offsets = [0, 32], sizes = [32, 1], strides = [1, 1]} : vector<32x128xf32> to vector<32x1xf32>
    %54 = tpu.reciprocal %53 : vector<32x1xf32> -> vector<32x1xf32>
    %55 = vector.broadcast %54 : vector<32x1xf32> to vector<32x128xf32>
    %56 = arith.mulf %52, %55 : vector<32x128xf32>
    %c8_i32_15 = arith.constant 8 : i32
    %57 = vector.broadcast %c8_i32_15 : i32 to vector<32x128xi32>
    %58 = arith.cmpi sge, %9, %57 : vector<32x128xi32>
    %c16_i32 = arith.constant 16 : i32
    %59 = vector.broadcast %c16_i32 : i32 to vector<32x128xi32>
    %60 = arith.cmpi slt, %9, %59 : vector<32x128xi32>
    %61 = arith.andi %58, %60 : vector<32x128xi1>
    %62 = arith.select %61, %56, %36 : vector<32x128xi1>, vector<32x128xf32>
    %63 = vector.extract_strided_slice %0 {offsets = [0, 2], sizes = [32, 1], strides = [1, 1]} : vector<32x8xf32> to vector<32x1xf32>
    %64 = vector.extract_strided_slice %1 {offsets = [6, 0], sizes = [1, 64], strides = [1, 1]} : vector<8x64xf32> to vector<1x64xf32>
    %65 = vector.broadcast %63 : vector<32x1xf32> to vector<32x64xf32>
    %66 = vector.broadcast %64 : vector<1x64xf32> to vector<32x64xf32>
    %67 = arith.addf %65, %66 : vector<32x64xf32>
    %cst_16 = arith.constant 2.000000e-01 : f32
    %68 = vector.broadcast %cst_16 : f32 to vector<32x64xf32>
    %69 = arith.mulf %68, %67 : vector<32x64xf32>
    %70 = arith.maximumf %67, %69 : vector<32x64xf32>
    %71 = arith.addf %70, %8 : vector<32x64xf32>
    %cst_17 = arith.constant dense<0xFF800000> : vector<32xf32>
    %72 = vector.multi_reduction <maximumf>, %71, %cst_17 [1] : vector<32x64xf32> to vector<32xf32>
    %73 = vector.shape_cast %72 : vector<32xf32> to vector<32x1xf32>
    %74 = vector.broadcast %73 : vector<32x1xf32> to vector<32x64xf32>
    %75 = arith.subf %71, %74 : vector<32x64xf32>
    %76 = arith.truncf %75 : vector<32x64xf32> to vector<32x64xbf16>
    %77 = math.exp %76 : vector<32x64xbf16>
    %cst_18 = arith.constant dense<0.000000e+00> : vector<32x128xf32>
    %78 = tpu.matmul %77, %2, %cst_18 {dimension_numbers = #tpu.dot_dimension_numbers<[1], [0], [0], [1], [0, 0, 1, 1], [], []>} : vector<32x64xbf16>, vector<64x128xbf16>, vector<32x128xf32> -> vector<32x128xf32>
    %79 = vector.extract_strided_slice %78 {offsets = [0, 32], sizes = [32, 1], strides = [1, 1]} : vector<32x128xf32> to vector<32x1xf32>
    %80 = tpu.reciprocal %79 : vector<32x1xf32> -> vector<32x1xf32>
    %81 = vector.broadcast %80 : vector<32x1xf32> to vector<32x128xf32>
    %82 = arith.mulf %78, %81 : vector<32x128xf32>
    %c16_i32_19 = arith.constant 16 : i32
    %83 = vector.broadcast %c16_i32_19 : i32 to vector<32x128xi32>
    %84 = arith.cmpi sge, %9, %83 : vector<32x128xi32>
    %c24_i32 = arith.constant 24 : i32
    %85 = vector.broadcast %c24_i32 : i32 to vector<32x128xi32>
    %86 = arith.cmpi slt, %9, %85 : vector<32x128xi32>
    %87 = arith.andi %84, %86 : vector<32x128xi1>
    %88 = arith.select %87, %82, %62 : vector<32x128xi1>, vector<32x128xf32>
    %89 = vector.extract_strided_slice %0 {offsets = [0, 3], sizes = [32, 1], strides = [1, 1]} : vector<32x8xf32> to vector<32x1xf32>
    %90 = vector.extract_strided_slice %1 {offsets = [7, 0], sizes = [1, 64], strides = [1, 1]} : vector<8x64xf32> to vector<1x64xf32>
    %91 = vector.broadcast %89 : vector<32x1xf32> to vector<32x64xf32>
    %92 = vector.broadcast %90 : vector<1x64xf32> to vector<32x64xf32>
    %93 = arith.addf %91, %92 : vector<32x64xf32>
    %cst_20 = arith.constant 2.000000e-01 : f32
    %94 = vector.broadcast %cst_20 : f32 to vector<32x64xf32>
    %95 = arith.mulf %94, %93 : vector<32x64xf32>
    %96 = arith.maximumf %93, %95 : vector<32x64xf32>
    %97 = arith.addf %96, %8 : vector<32x64xf32>
    %cst_21 = arith.constant dense<0xFF800000> : vector<32xf32>
    %98 = vector.multi_reduction <maximumf>, %97, %cst_21 [1] : vector<32x64xf32> to vector<32xf32>
    %99 = vector.shape_cast %98 : vector<32xf32> to vector<32x1xf32>
    %100 = vector.broadcast %99 : vector<32x1xf32> to vector<32x64xf32>
    %101 = arith.subf %97, %100 : vector<32x64xf32>
    %102 = arith.truncf %101 : vector<32x64xf32> to vector<32x64xbf16>
    %103 = math.exp %102 : vector<32x64xbf16>
    %cst_22 = arith.constant dense<0.000000e+00> : vector<32x128xf32>
    %104 = tpu.matmul %103, %2, %cst_22 {dimension_numbers = #tpu.dot_dimension_numbers<[1], [0], [0], [1], [0, 0, 1, 1], [], []>} : vector<32x64xbf16>, vector<64x128xbf16>, vector<32x128xf32> -> vector<32x128xf32>
    %105 = vector.extract_strided_slice %104 {offsets = [0, 32], sizes = [32, 1], strides = [1, 1]} : vector<32x128xf32> to vector<32x1xf32>
    %106 = tpu.reciprocal %105 : vector<32x1xf32> -> vector<32x1xf32>
    %107 = vector.broadcast %106 : vector<32x1xf32> to vector<32x128xf32>
    %108 = arith.mulf %104, %107 : vector<32x128xf32>
    %c24_i32_23 = arith.constant 24 : i32
    %109 = vector.broadcast %c24_i32_23 : i32 to vector<32x128xi32>
    %110 = arith.cmpi sge, %9, %109 : vector<32x128xi32>
    %c32_i32 = arith.constant 32 : i32
    %111 = vector.broadcast %c32_i32 : i32 to vector<32x128xi32>
    %112 = arith.cmpi slt, %9, %111 : vector<32x128xi32>
    %113 = arith.andi %110, %112 : vector<32x128xi1>
    %114 = arith.select %113, %108, %88 : vector<32x128xi1>, vector<32x128xf32>
    %cst_24 = arith.constant 0.000000e+00 : f32
    %115 = vector.broadcast %cst_24 : f32 to vector<32x128xf32>
    %116 = arith.cmpf ogt, %114, %115 : vector<32x128xf32>
    %cst_25 = arith.constant 0.000000e+00 : f32
    %117 = vector.broadcast %cst_25 : f32 to vector<32x128xf32>
    %118 = arith.minimumf %114, %117 : vector<32x128xf32>
    %119 = math.exp %118 : vector<32x128xf32>
    %cst_26 = arith.constant 1.000000e+00 : f32
    %120 = vector.broadcast %cst_26 : f32 to vector<32x128xf32>
    %121 = arith.subf %119, %120 : vector<32x128xf32>
    %122 = arith.select %116, %114, %121 : vector<32x128xi1>, vector<32x128xf32>
    %123 = arith.truncf %122 : vector<32x128xf32> to vector<32x128xbf16>
    %c0_27 = arith.constant 0 : index
    %c0_28 = arith.constant 0 : index
    %124 = vector.load %arg5[%c0_27, %c0_28] : memref<32x128xbf16, #tpu.memory_space<vmem>>, vector<32x128xbf16>
    tpu.vector_store %arg5[%c0_27, %c0_28], %123 {strides = array<i32>} : memref<32x128xbf16, #tpu.memory_space<vmem>>, vector<32x128xbf16>,
    return
  }
  func.func @transform_0(%arg0: i32) -> (i32, i32) {
    %c0_i32 = arith.constant 0 : i32
    %c0_i32_0 = arith.constant 0 : i32
    return %arg0, %c0_i32 : i32, i32
  }
  func.func @transform_1(%arg0: i32) -> (i32, i32) {
    %c0_i32 = arith.constant 0 : i32
    %c0_i32_0 = arith.constant 0 : i32
    %c0_i32_1 = arith.constant 0 : i32
    return %c0_i32, %c0_i32_0 : i32, i32
  }
  func.func @transform_2(%arg0: i32) -> (i32, i32) {
    %c0_i32 = arith.constant 0 : i32
    %c0_i32_0 = arith.constant 0 : i32
    %c0_i32_1 = arith.constant 0 : i32
    return %c0_i32, %c0_i32_0 : i32, i32
  }
  func.func @transform_3(%arg0: i32) -> (i32, i32) {
    %c0_i32 = arith.constant 0 : i32
    %c0_i32_0 = arith.constant 0 : i32
    return %arg0, %c0_i32 : i32, i32
  }
  func.func @transform_4(%arg0: i32) -> (i32, i32) {
    %c0_i32 = arith.constant 0 : i32
    %c0_i32_0 = arith.constant 0 : i32
    return %arg0, %c0_i32 : i32, i32
  }
}

module attributes {stable_mosaic.version = 11 : i64} {
  func.func @gat_project_kernel(%arg0: i32, %arg1: memref<32x128xbf16, #tpu.memory_space<vmem>>, %arg2: memref<128x128xbf16, #tpu.memory_space<vmem>>, %arg3: memref<128x8xbf16, #tpu.memory_space<vmem>>, %arg4: memref<32x128xbf16, #tpu.memory_space<vmem>>, %arg5: memref<32x8xf32, #tpu.memory_space<vmem>>) attributes {dimension_semantics = [#tpu.dimension_semantics<parallel>], iteration_bounds = array<i64: 2>, scalar_prefetch = 0 : i64, scratch_operands = 0 : i64, tpu.core_type = #tpu.core_type<tc>, window_params = [{transform_indices = @transform_0, window_bounds = array<i64: 32, 128>}, {pipeline_mode = #tpu.pipeline_mode<synchronous>, transform_indices = @transform_1, window_bounds = array<i64: 128, 128>}, {pipeline_mode = #tpu.pipeline_mode<synchronous>, transform_indices = @transform_2, window_bounds = array<i64: 128, 8>}, {transform_indices = @transform_3, window_bounds = array<i64: 32, 128>}, {transform_indices = @transform_4, window_bounds = array<i64: 32, 8>}]} {
    %c0 = arith.constant 0 : index
    %c0_0 = arith.constant 0 : index
    %0 = vector.load %arg1[%c0, %c0_0] : memref<32x128xbf16, #tpu.memory_space<vmem>>, vector<32x128xbf16>
    %c0_1 = arith.constant 0 : index
    %c0_2 = arith.constant 0 : index
    %1 = vector.load %arg2[%c0_1, %c0_2] : memref<128x128xbf16, #tpu.memory_space<vmem>>, vector<128x128xbf16>
    %cst = arith.constant dense<0.000000e+00> : vector<32x128xf32>
    %2 = tpu.matmul %0, %1, %cst {dimension_numbers = #tpu.dot_dimension_numbers<[1], [0], [0], [1], [0, 0, 1, 1], [], []>} : vector<32x128xbf16>, vector<128x128xbf16>, vector<32x128xf32> -> vector<32x128xf32>
    %3 = arith.truncf %2 : vector<32x128xf32> to vector<32x128xbf16>
    %c0_3 = arith.constant 0 : index
    %c0_4 = arith.constant 0 : index
    %4 = vector.load %arg3[%c0_3, %c0_4] : memref<128x8xbf16, #tpu.memory_space<vmem>>, vector<128x8xbf16>
    %cst_5 = arith.constant dense<0.000000e+00> : vector<32x8xf32>
    %5 = tpu.matmul %3, %4, %cst_5 {dimension_numbers = #tpu.dot_dimension_numbers<[1], [0], [0], [1], [0, 0, 1, 1], [], []>} : vector<32x128xbf16>, vector<128x8xbf16>, vector<32x8xf32> -> vector<32x8xf32>
    %c0_6 = arith.constant 0 : index
    %c0_7 = arith.constant 0 : index
    %6 = vector.load %arg5[%c0_6, %c0_7] : memref<32x8xf32, #tpu.memory_space<vmem>>, vector<32x8xf32>
    tpu.vector_store %arg5[%c0_6, %c0_7], %5 {strides = array<i32>} : memref<32x8xf32, #tpu.memory_space<vmem>>, vector<32x8xf32>,
    %7 = tpu.iota {dimensions = array<i32: 1>} : vector<32x128xi32>
    %c8_i32 = arith.constant 8 : i32
    %8 = vector.broadcast %c8_i32 : i32 to vector<32x128xi32>
    %9 = arith.cmpi eq, %7, %8 : vector<32x128xi32>
    %cst_8 = arith.constant 1.000000e+00 : f32
    %10 = vector.broadcast %cst_8 : f32 to vector<32x128xf32>
    %11 = arith.select %9, %10, %2 : vector<32x128xi1>, vector<32x128xf32>
    %12 = arith.truncf %11 : vector<32x128xf32> to vector<32x128xbf16>
    %c0_9 = arith.constant 0 : index
    %c0_10 = arith.constant 0 : index
    %13 = vector.load %arg4[%c0_9, %c0_10] : memref<32x128xbf16, #tpu.memory_space<vmem>>, vector<32x128xbf16>
    tpu.vector_store %arg4[%c0_9, %c0_10], %12 {strides = array<i32>} : memref<32x128xbf16, #tpu.memory_space<vmem>>, vector<32x128xbf16>,
    return
  }
  func.func @transform_0(%arg0: i32) -> (i32, i32) {
    %c0_i32 = arith.constant 0 : i32
    %c0_i32_0 = arith.constant 0 : i32
    return %arg0, %c0_i32 : i32, i32
  }
  func.func @transform_1(%arg0: i32) -> (i32, i32) {
    %c0_i32 = arith.constant 0 : i32
    %c0_i32_0 = arith.constant 0 : i32
    %c0_i32_1 = arith.constant 0 : i32
    return %c0_i32, %c0_i32_0 : i32, i32
  }
  func.func @transform_2(%arg0: i32) -> (i32, i32) {
    %c0_i32 = arith.constant 0 : i32
    %c0_i32_0 = arith.constant 0 : i32
    %c0_i32_1 = arith.constant 0 : i32
    return %c0_i32, %c0_i32_0 : i32, i32
  }
  func.func @transform_3(%arg0: i32) -> (i32, i32) {
    %c0_i32 = arith.constant 0 : i32
    %c0_i32_0 = arith.constant 0 : i32
    return %arg0, %c0_i32 : i32, i32
  }
  func.func @transform_4(%arg0: i32) -> (i32, i32) {
    %c0_i32 = arith.constant 0 : i32
    %c0_i32_0 = arith.constant 0 : i32
    return %arg0, %c0_i32 : i32, i32
  }
}

module attributes {stable_mosaic.version = 11 : i64} {
  func.func @gat_attn_kernel(%arg0: i32, %arg1: memref<32x8xf32, #tpu.memory_space<vmem>>, %arg2: memref<8x64xf32, #tpu.memory_space<vmem>>, %arg3: memref<64x128xbf16, #tpu.memory_space<vmem>>, %arg4: memref<32x64xi8, #tpu.memory_space<vmem>>, %arg5: memref<32x128xf32, #tpu.memory_space<vmem>>) attributes {dimension_semantics = [#tpu.dimension_semantics<parallel>], iteration_bounds = array<i64: 2>, scalar_prefetch = 0 : i64, scratch_operands = 0 : i64, tpu.core_type = #tpu.core_type<tc>, window_params = [{transform_indices = @transform_0, window_bounds = array<i64: 32, 8>}, {pipeline_mode = #tpu.pipeline_mode<synchronous>, transform_indices = @transform_1, window_bounds = array<i64: 8, 64>}, {pipeline_mode = #tpu.pipeline_mode<synchronous>, transform_indices = @transform_2, window_bounds = array<i64: 64, 128>}, {transform_indices = @transform_3, window_bounds = array<i64: 32, 64>}, {transform_indices = @transform_4, window_bounds = array<i64: 32, 128>}]} {
    %c0 = arith.constant 0 : index
    %c0_0 = arith.constant 0 : index
    %0 = vector.load %arg1[%c0, %c0_0] : memref<32x8xf32, #tpu.memory_space<vmem>>, vector<32x8xf32>
    %c0_1 = arith.constant 0 : index
    %c0_2 = arith.constant 0 : index
    %1 = vector.load %arg2[%c0_1, %c0_2] : memref<8x64xf32, #tpu.memory_space<vmem>>, vector<8x64xf32>
    %c0_3 = arith.constant 0 : index
    %c0_4 = arith.constant 0 : index
    %2 = vector.load %arg3[%c0_3, %c0_4] : memref<64x128xbf16, #tpu.memory_space<vmem>>, vector<64x128xbf16>
    %c0_5 = arith.constant 0 : index
    %c0_6 = arith.constant 0 : index
    %3 = vector.load %arg4[%c0_5, %c0_6] : memref<32x64xi8, #tpu.memory_space<vmem>>, vector<32x64xi8>
    %4 = arith.sitofp %3 : vector<32x64xi8> to vector<32x64xf32>
    %cst = arith.constant 1.000000e+00 : f32
    %5 = vector.broadcast %cst : f32 to vector<32x64xf32>
    %6 = arith.subf %4, %5 : vector<32x64xf32>
    %cst_7 = arith.constant 1.000000e+30 : f32
    %7 = vector.broadcast %cst_7 : f32 to vector<32x64xf32>
    %8 = arith.mulf %6, %7 : vector<32x64xf32>
    %9 = tpu.iota {dimensions = array<i32: 1>} : vector<32x128xi32>
    %cst_8 = arith.constant 0.000000e+00 : f32
    %10 = vector.broadcast %cst_8 : f32 to vector<32x128xf32>
    %11 = vector.extract_strided_slice %0 {offsets = [0, 0], sizes = [32, 1], strides = [1, 1]} : vector<32x8xf32> to vector<32x1xf32>
    %12 = vector.extract_strided_slice %1 {offsets = [1, 0], sizes = [1, 64], strides = [1, 1]} : vector<8x64xf32> to vector<1x64xf32>
    %13 = vector.broadcast %11 : vector<32x1xf32> to vector<32x64xf32>
    %14 = vector.broadcast %12 : vector<1x64xf32> to vector<32x64xf32>
    %15 = arith.addf %13, %14 : vector<32x64xf32>
    %cst_9 = arith.constant 2.000000e-01 : f32
    %16 = vector.broadcast %cst_9 : f32 to vector<32x64xf32>
    %17 = arith.mulf %16, %15 : vector<32x64xf32>
    %18 = arith.maximumf %15, %17 : vector<32x64xf32>
    %19 = arith.addf %18, %8 : vector<32x64xf32>
    %cst_10 = arith.constant dense<0xFF800000> : vector<32xf32>
    %20 = vector.multi_reduction <maximumf>, %19, %cst_10 [1] : vector<32x64xf32> to vector<32xf32>
    %21 = vector.shape_cast %20 : vector<32xf32> to vector<32x1xf32>
    %22 = vector.broadcast %21 : vector<32x1xf32> to vector<32x64xf32>
    %23 = arith.subf %19, %22 : vector<32x64xf32>
    %24 = arith.truncf %23 : vector<32x64xf32> to vector<32x64xbf16>
    %25 = math.exp %24 : vector<32x64xbf16>
    %cst_11 = arith.constant dense<0.000000e+00> : vector<32x128xf32>
    %26 = tpu.matmul %25, %2, %cst_11 {dimension_numbers = #tpu.dot_dimension_numbers<[1], [0], [0], [1], [0, 0, 1, 1], [], []>} : vector<32x64xbf16>, vector<64x128xbf16>, vector<32x128xf32> -> vector<32x128xf32>
    %27 = vector.extract_strided_slice %26 {offsets = [0, 8], sizes = [32, 1], strides = [1, 1]} : vector<32x128xf32> to vector<32x1xf32>
    %28 = tpu.reciprocal %27 : vector<32x1xf32> -> vector<32x1xf32>
    %29 = vector.broadcast %28 : vector<32x1xf32> to vector<32x128xf32>
    %30 = arith.mulf %26, %29 : vector<32x128xf32>
    %c0_i32 = arith.constant 0 : i32
    %31 = vector.broadcast %c0_i32 : i32 to vector<32x128xi32>
    %32 = arith.cmpi sge, %9, %31 : vector<32x128xi32>
    %c8_i32 = arith.constant 8 : i32
    %33 = vector.broadcast %c8_i32 : i32 to vector<32x128xi32>
    %34 = arith.cmpi slt, %9, %33 : vector<32x128xi32>
    %35 = arith.andi %32, %34 : vector<32x128xi1>
    %36 = arith.select %35, %30, %10 : vector<32x128xi1>, vector<32x128xf32>
    %c0_12 = arith.constant 0 : index
    %c0_13 = arith.constant 0 : index
    %37 = vector.load %arg5[%c0_12, %c0_13] : memref<32x128xf32, #tpu.memory_space<vmem>>, vector<32x128xf32>
    tpu.vector_store %arg5[%c0_12, %c0_13], %36 {strides = array<i32>} : memref<32x128xf32, #tpu.memory_space<vmem>>, vector<32x128xf32>,
    return
  }
  func.func @transform_0(%arg0: i32) -> (i32, i32) {
    %c0_i32 = arith.constant 0 : i32
    %c0_i32_0 = arith.constant 0 : i32
    return %arg0, %c0_i32 : i32, i32
  }
  func.func @transform_1(%arg0: i32) -> (i32, i32) {
    %c0_i32 = arith.constant 0 : i32
    %c0_i32_0 = arith.constant 0 : i32
    %c0_i32_1 = arith.constant 0 : i32
    return %c0_i32, %c0_i32_0 : i32, i32
  }
  func.func @transform_2(%arg0: i32) -> (i32, i32) {
    %c0_i32 = arith.constant 0 : i32
    %c0_i32_0 = arith.constant 0 : i32
    %c0_i32_1 = arith.constant 0 : i32
    return %c0_i32, %c0_i32_0 : i32, i32
  }
  func.func @transform_3(%arg0: i32) -> (i32, i32) {
    %c0_i32 = arith.constant 0 : i32
    %c0_i32_0 = arith.constant 0 : i32
    return %arg0, %c0_i32 : i32, i32
  }
  func.func @transform_4(%arg0: i32) -> (i32, i32) {
    %c0_i32 = arith.constant 0 : i32
    %c0_i32_0 = arith.constant 0 : i32
    return %arg0, %c0_i32 : i32, i32
  }
}

</mosaic_0001>

<llo_original>
// kernel: gat_forward.6
$region0: #{gat_forward.6}
  #allocation0 [shape = 'u32[]', space=smem, size = 0x4, offset = 0x4, fixed_abs, tag = 'smem constant byte address 0x4 - core index']
  #allocation1 [shape = 'u32[144,128]{1,0:T(1,128)}', space=vmem, size = 0x12000, scoped, tag = 'internal scratch']
  %s0 = inlined_call_operand.vmem [shape: bf16[64,128], index: 0, kind: input, shape index: {}]
  %s1 = inlined_call_operand.vmem [shape: bf16[128,128], index: 1, kind: input, shape index: {}]
  %s2 = inlined_call_operand.vmem [shape: bf16[128,8], index: 2, kind: input, shape index: {}]
  %s3 = inlined_call_operand.vmem [shape: bf16[64,128], index: 3, kind: output, shape index: {0}]
  %s4 = inlined_call_operand.vmem [shape: f32[64,8], index: 4, kind: output, shape index: {1}]
  %5 = xla_tuple %s3, %s4
  %s6 = sld [smem:[#allocation0]]
  $region53: #{gat_forward.6} parent=0
    _
  %s8 = ssub.s32 1, %s6
  %s9 = scalar_select 0, %s8, %s6
  loop: start=0, step=1, limit=4
  $region2: #{gat_forward.6} parent=0 // loop_pre_header
    _
  $region3: #{gat_forward.6} parent=0 // loop_header
    %s11 = sphi 0, %s15
    %p12 = scmp.ge.s32.totalorder %s11, 4
    %s21 = sphi 0, %s23
    %s24 = sphi 0, %s21
    %s25 = sphi 0, %s24
    %s41 = sphi 0, %s25
    %s45 = sphi 0, %s45
    %s47 = sphi 0, %s45
    %s48 = sphi 0, %s47
    %s62 = sphi 0, %s48
    %s66 = sphi 0, %s66
    %s68 = sphi 0, %s66
    %s69 = sphi 0, %s68
    %s83 = sphi 0, %s69
    %s89 = sphi 0, %s91
    %s92 = sphi 0, %s89
    %s93 = sphi 0, %s92
    %s109 = sphi 0, %s93
    %s115 = sphi 0, %s117
    %s118 = sphi 0, %s115
    %s119 = sphi 0, %s118
    %s135 = sphi 0, %s119
  $region4: #{gat_forward.6} parent=0 // loop_header_branch
    %14 = sbr.rel (%p12) target = $region8
  $region5: #{gat_forward.6} parent=0 // loop_body
    %s16 = ssub.s32 %s11, 1
    %s17 = ssub.s32 %s11, 2
    %s18 = sadd.s32 %s11, 1
    %s19 = ssub.s32 %s11, %s18
    %p20 = scmp.eq.s32.totalorder %s19, 0
    %s22 = sadd.s32 %s21, 1
    %s23 = scalar_select %p20, %s21, %s22
    %p26 = pneg %p20
    %p27 = scmp.eq.s32.totalorder %s11, 1
    %p28 = por %p26, %p27
    %p29 = scmp.ne.s32.totalorder %s21, %s24
    %p30 = scmp.eq.s32.totalorder %s11, 0
    %p31 = por %p29, %p30
    %p32 = scmp.ne.s32.totalorder %s21, %s24
    %p33 = scmp.eq.s32.totalorder %s16, 1
    %p34 = por %p32, %p33
    %p35 = scmp.ne.s32.totalorder %s24, %s25
    %p36 = scmp.eq.s32.totalorder %s16, 0
    %p37 = por %p35, %p36
    %p38 = scmp.ne.s32.totalorder %s24, %s25
    %p39 = scmp.eq.s32.totalorder %s17, 1
    %p40 = por %p38, %p39
    %p42 = scmp.ne.s32.totalorder %s25, %s41
    %p43 = scmp.eq.s32.totalorder %s17, 0
    %p44 = por %p42, %p43
    %s46 = sadd.s32 %s45, 1
    %p49 = scmp.eq.s32.totalorder %s11, 1
    %p50 = scmp.ne.s32.totalorder %s45, %s47
    %p51 = scmp.eq.s32.totalorder %s11, 0
    %p52 = por %p50, %p51
    %p53 = scmp.ne.s32.totalorder %s45, %s47
    %p54 = scmp.eq.s32.totalorder %s16, 1
    %p55 = por %p53, %p54
    %p56 = scmp.ne.s32.totalorder %s47, %s48
    %p57 = scmp.eq.s32.totalorder %s16, 0
    %p58 = por %p56, %p57
    %p59 = scmp.ne.s32.totalorder %s47, %s48
    %p60 = scmp.eq.s32.totalorder %s17, 1
    %p61 = por %p59, %p60
    %p63 = scmp.ne.s32.totalorder %s48, %s62
    %p64 = scmp.eq.s32.totalorder %s17, 0
    %p65 = por %p63, %p64
    %s67 = sadd.s32 %s66, 1
    %p70 = scmp.eq.s32.totalorder %s11, 1
    %p71 = scmp.ne.s32.totalorder %s66, %s68
    %p72 = scmp.eq.s32.totalorder %s11, 0
    %p73 = por %p71, %p72
    %p74 = scmp.ne.s32.totalorder %s66, %s68
    %p75 = scmp.eq.s32.totalorder %s16, 1
    %p76 = por %p74, %p75
    %p77 = scmp.ne.s32.totalorder %s68, %s69
    %p78 = scmp.eq.s32.totalorder %s16, 0
    %p79 = por %p77, %p78
    %p80 = scmp.ne.s32.totalorder %s68, %s69
    %p81 = scmp.eq.s32.totalorder %s17, 1
    %p82 = por %p80, %p81
    %p84 = scmp.ne.s32.totalorder %s69, %s83
    %p85 = scmp.eq.s32.totalorder %s17, 0
    %p86 = por %p84, %p85
    %s87 = ssub.s32 %s11, %s18
    %p88 = scmp.eq.s32.totalorder %s87, 0
    %s90 = sadd.s32 %s89, 1
    %s91 = scalar_select %p88, %s89, %s90
    %p94 = pneg %p88
    %p95 = scmp.eq.s32.totalorder %s11, 1
    %p96 = por %p94, %p95
    %p97 = scmp.ne.s32.totalorder %s89, %s92
    %p98 = scmp.eq.s32.totalorder %s11, 0
    %p99 = por %p97, %p98
    %p100 = scmp.ne.s32.totalorder %s89, %s92
    %p101 = scmp.eq.s32.totalorder %s16, 1
    %p102 = por %p100, %p101
    %p103 = scmp.ne.s32.totalorder %s92, %s93
    %p104 = scmp.eq.s32.totalorder %s16, 0
    %p105 = por %p103, %p104
    %p106 = scmp.ne.s32.totalorder %s92, %s93
    %p107 = scmp.eq.s32.totalorder %s17, 1
    %p108 = por %p106, %p107
    %p110 = scmp.ne.s32.totalorder %s93, %s109
    %p111 = scmp.eq.s32.totalorder %s17, 0
    %p112 = por %p110, %p111
    %s113 = ssub.s32 %s11, %s18
    %p114 = scmp.eq.s32.totalorder %s113, 0
    %s116 = sadd.s32 %s115, 1
    %s117 = scalar_select %p114, %s115, %s116
    %p120 = pneg %p114
    %p121 = scmp.eq.s32.totalorder %s11, 1
    %p122 = por %p120, %p121
    %p123 = scmp.ne.s32.totalorder %s115, %s118
    %p124 = scmp.eq.s32.totalorder %s11, 0
    %p125 = por %p123, %p124
    %p126 = scmp.ne.s32.totalorder %s115, %s118
    %p127 = scmp.eq.s32.totalorder %s16, 1
    %p128 = por %p126, %p127
    %p129 = scmp.ne.s32.totalorder %s118, %s119
    %p130 = scmp.eq.s32.totalorder %s16, 0
    %p131 = por %p129, %p130
    %p132 = scmp.ne.s32.totalorder %s118, %s119
    %p133 = scmp.eq.s32.totalorder %s17, 1
    %p134 = por %p132, %p133
    %p136 = scmp.ne.s32.totalorder %s119, %s135
    %p137 = scmp.eq.s32.totalorder %s17, 0
    %p138 = por %p136, %p137
    %p139 = scmp.le.s32.totalorder 1, %s11
    %p140 = scmp.lt.s32.totalorder %s11, 3
    %p141 = pnand %p139, %p140
    %p142 = pneg %p141
    // Predicated region
    $region9: #{gat_forward.6} parent=5 // pred_check
      _
    $region10: #{gat_forward.6} parent=5 // pred_check_branch
      %144 = sbr.rel (%p141) target = $region12
    $region11: #{gat_forward.6} parent=5 // pred_region
      %s145 = ssub.s32 %s11, 1
      // Predicated region
      $region13: #{gat_forward.6} parent=11 // pred_check
        %p146 = pneg %p58
      $region14: #{gat_forward.6} parent=11 // pred_check_branch
        %148 = sbr.rel (%p146) target = $region16
      $region15: #{gat_forward.6} parent=11 // pred_region
        _
      $region16: #{gat_forward.6} parent=11 // pred_fallthru
        _
      // Predicated region
      $region17: #{gat_forward.6} parent=11 // pred_check
        %p149 = pneg %p79
      $region18: #{gat_forward.6} parent=11 // pred_check_branch
        %151 = sbr.rel (%p149) target = $region20
      $region19: #{gat_forward.6} parent=11 // pred_region
        _
      $region20: #{gat_forward.6} parent=11 // pred_fallthru
        _
    $region12: #{gat_forward.6} parent=5 // pred_fallthru
      _
    %p152 = scmp.lt.s32.totalorder %s11, 2
    // Predicated region
    $region21: #{gat_forward.6} parent=5 // pred_check
      %p153 = pneg %p152
    $region22: #{gat_forward.6} parent=5 // pred_check_branch
      %155 = sbr.rel (%p153) target = $region24
    $region23: #{gat_forward.6} parent=5 // pred_region
      // Predicated region
      $region25: #{gat_forward.6} parent=23 // pred_check
        %p156 = pneg %p31
      $region26: #{gat_forward.6} parent=23 // pred_check_branch
        %158 = sbr.rel (%p156) target = $region28
      $region27: #{gat_forward.6} parent=23 // pred_region
        %s159 = smul.u32 4, %s11
        %p160 = scmp.lt.s32.totalorder %s159, 7
        %s161 = scalar_select %p160, %s159, 7
        %s162 = smul.addr %s161, 4
        %s163 = scalar_lea.vmem %s0, %s162
        %s164 = smul.u32 4, %s11
      $region28: #{gat_forward.6} parent=23 // pred_fallthru
        _
    $region24: #{gat_forward.6} parent=5 // pred_fallthru
      _
    %p165 = scmp.le.s32.totalorder 1, %s11
    %p166 = scmp.lt.s32.totalorder %s11, 3
    %p167 = pnand %p165, %p166
    %p168 = pneg %p167
    // Predicated region
    $region29: #{gat_forward.6} parent=5 // pred_check
      _
    $region30: #{gat_forward.6} parent=5 // pred_check_branch
      %170 = sbr.rel (%p167) target = $region32
    $region31: #{gat_forward.6} parent=5 // pred_region
      %s171 = ssub.s32 %s11, 1
      %s172 = smul.u32 4, %s16
      %p173 = scmp.lt.s32.totalorder %s172, 7
      %s174 = scalar_select %p173, %s172, 7
      %s175 = smul.addr %s174, 4
      %s176 = scalar_lea.vmem %s0, %s175
      %p177 = pneg %p37
      %p178 = pneg %p34
      %p179 = pneg %p58
      %p180 = pneg %p55
      %p181 = pneg %p79
      %p182 = pneg %p76
      %p183 = pneg %p105
      %p184 = pneg %p102
      %s185 = smul.u32 4, %s16
      %p186 = scmp.lt.s32.totalorder %s185, 7
      %s187 = scalar_select %p186, %s185, 7
      %s188 = smul.addr %s187, 4
      %s189 = scalar_lea.vmem %s3, %s188
      %p190 = pneg %p131
      %p191 = pneg %p128
      %s192 = smul.u32 4, %s16
      %p193 = scmp.lt.s32.totalorder %s192, 7
      %s194 = scalar_select %p193, %s192, 7
      %s195 = smul.addr %s194, 8
      %s196 = scalar_lea.vmem %s4, %s195
      %s197 = smul.u32 4, %s16
      %p198 = scmp.lt.s32.totalorder %s197, 7
      %s199 = scalar_select %p198, %s197, 7
      %s200 = smul.addr %s199, 4
      %s201 = scalar_lea.vmem %s0, %s200
      %s202 = smul.u32 4, %s16
      %s203 = smul.u32 4, %s16
      %p204 = scmp.lt.s32.totalorder %s203, 7
      %s205 = scalar_select %p204, %s203, 7
      %s206 = smul.addr %s205, 4
      %s207 = scalar_lea.vmem %s3, %s206
      %s208 = smul.u32 4, %s16
      %s209 = smul.u32 4, %s16
      %p210 = scmp.lt.s32.totalorder %s209, 7
      %s211 = scalar_select %p210, %s209, 7
      %s212 = smul.addr %s211, 8
      %s213 = scalar_lea.vmem %s4, %s212
      %s214 = smul.u32 4, %s16
      %v216 = vld [vmem:[%s201] sm:$0xf]
      %v217 = vld [vmem:[%s201 + $0x4] sm:$0xf]
      %v218 = vld [vmem:[%s201 + $0x8] sm:$0xf]
      %v219 = vld [vmem:[%s201 + $0xc] sm:$0xf]
      %v220 = vld [vmem:[%s1] sm:$0xf]
      %v221 = vld [vmem:[%s1 + $0x4] sm:$0xf]
      %v222 = vld [vmem:[%s1 + $0x8] sm:$0xf]
      %v223 = vld [vmem:[%s1 + $0xc] sm:$0xf]
      %v224 = vld [vmem:[%s1 + $0x10] sm:$0xf]
      %v225 = vld [vmem:[%s1 + $0x14] sm:$0xf]
      %v226 = vld [vmem:[%s1 + $0x18] sm:$0xf]
      %v227 = vld [vmem:[%s1 + $0x1c] sm:$0xf]
      %v228 = vld [vmem:[%s1 + $0x20] sm:$0xf]
      %v229 = vld [vmem:[%s1 + $0x24] sm:$0xf]
      %v230 = vld [vmem:[%s1 + $0x28] sm:$0xf]
      %v231 = vld [vmem:[%s1 + $0x2c] sm:$0xf]
      %v232 = vld [vmem:[%s1 + $0x30] sm:$0xf]
      %v233 = vld [vmem:[%s1 + $0x34] sm:$0xf]
      %v234 = vld [vmem:[%s1 + $0x38] sm:$0xf]
      %v235 = vld [vmem:[%s1 + $0x3c] sm:$0xf]
      %v240 = vunpack.c.l.b16 %v216
      %v241 = vunpack.c.l.b16 %v217
      %v242 = vunpack.c.l.b16 %v218
      %v243 = vunpack.c.l.b16 %v219
      %v244 = vpack.c.b16 %v241, %v240
      %v245 = vpack.c.b16 %v243, %v242
      %v264 = vunpack.c.l.b16 %v220
      %v265 = vunpack.c.l.b16 %v221
      %v266 = vunpack.c.l.b16 %v222
      %v267 = vunpack.c.l.b16 %v223
      %v268 = vunpack.c.l.b16 %v224
      %v269 = vunpack.c.l.b16 %v225
      %v270 = vunpack.c.l.b16 %v226
      %v271 = vunpack.c.l.b16 %v227
      %v272 = vunpack.c.l.b16 %v228
      %v273 = vunpack.c.l.b16 %v229
      %v274 = vunpack.c.l.b16 %v230
      %v275 = vunpack.c.l.b16 %v231
      %v276 = vunpack.c.l.b16 %v232
      %v277 = vunpack.c.l.b16 %v233
      %v278 = vunpack.c.l.b16 %v234
      %v279 = vunpack.c.l.b16 %v235
      %v280 = vpack.c.b16 %v265, %v264
      %v281 = vpack.c.b16 %v267, %v266
      %v282 = vpack.c.b16 %v269, %v268
      %v283 = vpack.c.b16 %v271, %v270
      %v284 = vpack.c.b16 %v273, %v272
      %v285 = vpack.c.b16 %v275, %v274
      %v286 = vpack.c.b16 %v277, %v276
      %v287 = vpack.c.b16 %v279, %v278
      %296 = vmatprep.subr.bf16.mxu0 0
      %297 = vmatpush1.bf16.msra.mxu0 %v280
      %298 = vmatprep.subr.bf16.mxu0 0
      %299 = vmatpush1.bf16.msra.mxu0 %v281
      %300 = vmatprep.subr.bf16.mxu0 0
      %301 = vmatpush1.bf16.msra.mxu0 %v282
      %302 = vmatprep.subr.bf16.mxu0 0
      %303 = vmatpush1.bf16.msra.mxu0 %v283
      %304 = vmatprep.subr.bf16.mxu0 0
      %305 = vmatpush1.bf16.msra.mxu0 %v284
      %306 = vmatprep.subr.bf16.mxu0 0
      %307 = vmatpush1.bf16.msra.mxu0 %v285
      %308 = vmatprep.subr.bf16.mxu0 0
      %309 = vmatpush1.bf16.msra.mxu0 %v286
      %310 = vmatprep.subr.bf16.mxu0 0
      %311 = vmatpush1.bf16.msra.mxu0 %v287
      %312 = vmatprep.subr.bf16.mxu0 0
      %313 = vmatpush1.bf16.msra.mxu0 0
      %314 = vmatprep.subr.bf16.mxu0 0
      %315 = vmatpush1.bf16.msra.mxu0 0
      %316 = vmatprep.subr.bf16.mxu0 0
      %317 = vmatpush1.bf16.msra.mxu0 0
      %318 = vmatprep.subr.bf16.mxu0 0
      %319 = vmatpush1.bf16.msra.mxu0 0
      %320 = vmatprep.subr.bf16.mxu0 0
      %321 = vmatpush1.bf16.msra.mxu0 0
      %322 = vmatprep.subr.bf16.mxu0 0
      %323 = vmatpush1.bf16.msra.mxu0 0
      %324 = vmatprep.subr.bf16.mxu0 0
      %325 = vmatpush1.bf16.msra.mxu0 0
      %326 = vmatprep.subr.bf16.mxu0 0
      %327 = vmatpush1.bf16.msra.mxu0 0
      %328 = vmatprep.mubr.bf16.mxu0 0
      %329 = vmatmul.mubr.bf16.gmra.mrb[0].mxu0 %v244
      %v330 = vpop.f32.mrb[0].mxu0
      %v331 = vadd.f32 0.0, %v330
      %v332 = vpop.f32.mrb[0].mxu0
      %v333 = vpop.f32.mrb[0].mxu0
      %v334 = vadd.f32 0.0, %v333
      %v335 = vpop.f32.mrb[0].mxu0
      %336 = vmatprep.mubr.bf16.mxu0 0
      %337 = vmatmul.mubr.bf16.gmra.mrb[0].mxu0 %v245
      %v338 = vpop.f32.mrb[0].mxu0
      %v339 = vadd.f32 0.0, %v338
      %v340 = vpop.f32.mrb[0].mxu0
      %v341 = vpop.f32.mrb[0].mxu0
      %v342 = vadd.f32 0.0, %v341
      %v343 = vpop.f32.mrb[0].mxu0
      %344 = vdwg.mxu0
      %v345 = vpack.c.bf16 %v334, %v331
      %v346 = vpack.c.bf16 %v342, %v339
      %v347 = vld [vmem:[%s2] sm:$0xf]
      %v348 = vld [vmem:[%s2 + $0x4] sm:$0xf]
      %v349 = vld [vmem:[%s2 + $0x8] sm:$0xf]
      %v350 = vld [vmem:[%s2 + $0xc] sm:$0xf]
      %v351 = vld [vmem:[%s2 + $0x10] sm:$0xf]
      %v352 = vld [vmem:[%s2 + $0x14] sm:$0xf]
      %v353 = vld [vmem:[%s2 + $0x18] sm:$0xf]
      %v354 = vld [vmem:[%s2 + $0x1c] sm:$0xf]
      %v355 = vld [vmem:[%s2 + $0x20] sm:$0xf]
      %v356 = vld [vmem:[%s2 + $0x24] sm:$0xf]
      %v357 = vld [vmem:[%s2 + $0x28] sm:$0xf]
      %v358 = vld [vmem:[%s2 + $0x2c] sm:$0xf]
      %v359 = vld [vmem:[%s2 + $0x30] sm:$0xf]
      %v360 = vld [vmem:[%s2 + $0x34] sm:$0xf]
      %v361 = vld [vmem:[%s2 + $0x38] sm:$0xf]
      %v362 = vld [vmem:[%s2 + $0x3c] sm:$0xf]
      %v379 = vunpack.c.l.b16 %v347
      %v380 = vunpack.c.l.b16 %v348
      %v381 = vunpack.c.l.b16 %v349
      %v382 = vunpack.c.l.b16 %v350
      %v383 = vunpack.c.l.b16 %v351
      %v384 = vunpack.c.l.b16 %v352
      %v385 = vunpack.c.l.b16 %v353
      %v386 = vunpack.c.l.b16 %v354
      %v387 = vunpack.c.l.b16 %v355
      %v388 = vunpack.c.l.b16 %v356
      %v389 = vunpack.c.l.b16 %v357
      %v390 = vunpack.c.l.b16 %v358
      %v391 = vunpack.c.l.b16 %v359
      %v392 = vunpack.c.l.b16 %v360
      %v393 = vunpack.c.l.b16 %v361
      %v394 = vunpack.c.l.b16 %v362
      %v395 = vpack.c.b16 %v380, %v379
      %v396 = vpack.c.b16 %v382, %v381
      %v397 = vpack.c.b16 %v384, %v383
      %v398 = vpack.c.b16 %v386, %v385
      %v399 = vpack.c.b16 %v388, %v387
      %v400 = vpack.c.b16 %v390, %v389
      %v401 = vpack.c.b16 %v392, %v391
      %v402 = vpack.c.b16 %v394, %v393
      %411 = vmatprep.subr.bf16.mxu0 0
      %412 = vmatpush1.bf16.msra.mxu0 %v395
      %413 = vmatprep.subr.bf16.mxu0 0
      %414 = vmatpush1.bf16.msra.mxu0 %v396
      %415 = vmatprep.subr.bf16.mxu0 0
      %416 = vmatpush1.bf16.msra.mxu0 %v397
      %417 = vmatprep.subr.bf16.mxu0 0
      %418 = vmatpush1.bf16.msra.mxu0 %v398
      %419 = vmatprep.subr.bf16.mxu0 0
      %420 = vmatpush1.bf16.msra.mxu0 %v399
      %421 = vmatprep.subr.bf16.mxu0 0
      %422 = vmatpush1.bf16.msra.mxu0 %v400
      %423 = vmatprep.subr.bf16.mxu0 0
      %424 = vmatpush1.bf16.msra.mxu0 %v401
      %425 = vmatprep.subr.bf16.mxu0 0
      %426 = vmatpush1.bf16.msra.mxu0 %v402
      %427 = vmatprep.subr.bf16.mxu0 0
      %428 = vmatpush1.bf16.msra.mxu0 0
      %429 = vmatprep.subr.bf16.mxu0 0
      %430 = vmatpush1.bf16.msra.mxu0 0
      %431 = vmatprep.subr.bf16.mxu0 0
      %432 = vmatpush1.bf16.msra.mxu0 0
      %433 = vmatprep.subr.bf16.mxu0 0
      %434 = vmatpush1.bf16.msra.mxu0 0
      %435 = vmatprep.subr.bf16.mxu0 0
      %436 = vmatpush1.bf16.msra.mxu0 0
      %437 = vmatprep.subr.bf16.mxu0 0
      %438 = vmatpush1.bf16.msra.mxu0 0
      %439 = vmatprep.subr.bf16.mxu0 0
      %440 = vmatpush1.bf16.msra.mxu0 0
      %441 = vmatprep.subr.bf16.mxu0 0
      %442 = vmatpush1.bf16.msra.mxu0 0
      %443 = vmatprep.mubr.bf16.mxu0 0
      %444 = vmatmul.mubr.bf16.gmra.mrb[0].mxu0 %v345
      %v445 = vpop.f32.mrb[0].mxu0
      %v446 = vadd.f32 0.0, %v445
      %v447 = vpop.f32.mrb[0].mxu0
      %v448 = vpop.f32.mrb[0].mxu0
      %v449 = vadd.f32 0.0, %v448
      %v450 = vpop.f32.mrb[0].mxu0
      %451 = vmatprep.mubr.bf16.mxu0 0
      %452 = vmatmul.mubr.bf16.gmra.mrb[0].mxu0 %v346
      %v453 = vpop.f32.mrb[0].mxu0
      %v454 = vadd.f32 0.0, %v453
      %v455 = vpop.f32.mrb[0].mxu0
      %v456 = vpop.f32.mrb[0].mxu0
      %v457 = vadd.f32 0.0, %v456
      %v458 = vpop.f32.mrb[0].mxu0
      %459 = vdwg.mxu0
      %vm460 = vcmask 64512
      %461 = vst.msk [vmem:[%s213] sm:$0xff] %vm460, %v446
      %462 = vst.msk [vmem:[%s213 + $0x8] sm:$0xff] %vm460, %v449
      %463 = vst.msk [vmem:[%s213 + $0x10] sm:$0xff] %vm460, %v454
      %464 = vst.msk [vmem:[%s213 + $0x18] sm:$0xff] %vm460, %v457
      %v465 = vlaneseq
      %v466 = vand.u32 %v465, 127
      %vm467 = vcmp.eq.s32.totalorder %v466, 8
      %v468 = vsel %vm467, 1.0, %v331
      %v469 = vsel %vm467, 1.0, %v334
      %v470 = vsel %vm467, 1.0, %v339
      %v471 = vsel %vm467, 1.0, %v342
      %v472 = vpack.c.bf16 %v469, %v468
      %v473 = vpack.c.bf16 %v471, %v470
      %v476 = vunpack.c.l.b16 %v472
      %v477 = vunpack.c.h.b16 %v472
      %v478 = vunpack.c.l.b16 %v473
      %v479 = vunpack.c.h.b16 %v473
      %v480 = vpack.c.b16 %v476, %v476
      %v481 = vpack.c.b16 %v477, %v477
      %v482 = vpack.c.b16 %v478, %v478
      %v483 = vpack.c.b16 %v479, %v479
      %488 = vst [vmem:[%s207] sm:$0xf] %v480
      %489 = vst [vmem:[%s207 + $0x4] sm:$0xf] %v481
      %490 = vst [vmem:[%s207 + $0x8] sm:$0xf] %v482
      %491 = vst [vmem:[%s207 + $0xc] sm:$0xf] %v483
      %s492 = smul.u32 4, %s16
      %p493 = scmp.lt.s32.totalorder %s492, 7
      %s494 = scalar_select %p493, %s492, 7
      %s495 = smul.addr %s494, 4
      %s496 = scalar_lea.vmem %s3, %s495
      %s497 = smul.u32 4, %s16
      %p498 = scmp.lt.s32.totalorder %s497, 7
      %s499 = scalar_select %p498, %s497, 7
      %s500 = smul.addr %s499, 8
      %s501 = scalar_lea.vmem %s4, %s500
      // Predicated region
      $region33: #{gat_forward.6} parent=31 // pred_check
        %p502 = pneg %p102
      $region34: #{gat_forward.6} parent=31 // pred_check_branch
        %504 = sbr.rel (%p502) target = $region36
      $region35: #{gat_forward.6} parent=31 // pred_region
        %s505 = smul.u32 4, %s16
      $region36: #{gat_forward.6} parent=31 // pred_fallthru
        _
      // Predicated region
      $region37: #{gat_forward.6} parent=31 // pred_check
        %p506 = pneg %p128
      $region38: #{gat_forward.6} parent=31 // pred_check_branch
        %508 = sbr.rel (%p506) target = $region40
      $region39: #{gat_forward.6} parent=31 // pred_region
        %s509 = smul.u32 4, %s16
      $region40: #{gat_forward.6} parent=31 // pred_fallthru
        _
    $region32: #{gat_forward.6} parent=5 // pred_fallthru
      _
    %p510 = scmp.le.s32.totalorder 2, %s11
    // Predicated region
    $region41: #{gat_forward.6} parent=5 // pred_check
      %p511 = pneg %p510
    $region42: #{gat_forward.6} parent=5 // pred_check_branch
      %513 = sbr.rel (%p511) target = $region44
    $region43: #{gat_forward.6} parent=5 // pred_region
      %s514 = ssub.s32 %s11, 2
      // Predicated region
      $region45: #{gat_forward.6} parent=43 // pred_check
        %p515 = pneg %p108
      $region46: #{gat_forward.6} parent=43 // pred_check_branch
        %517 = sbr.rel (%p515) target = $region48
      $region47: #{gat_forward.6} parent=43 // pred_region
        %s518 = smul.u32 4, %s17
        %p519 = scmp.lt.s32.totalorder %s518, 7
        %s520 = scalar_select %p519, %s518, 7
        %s521 = smul.addr %s520, 4
        %s522 = scalar_lea.vmem %s3, %s521
      $region48: #{gat_forward.6} parent=43 // pred_fallthru
        _
      // Predicated region
      $region49: #{gat_forward.6} parent=43 // pred_check
        %p523 = pneg %p134
      $region50: #{gat_forward.6} parent=43 // pred_check_branch
        %525 = sbr.rel (%p523) target = $region52
      $region51: #{gat_forward.6} parent=43 // pred_region
        %s526 = smul.u32 4, %s17
        %p527 = scmp.lt.s32.totalorder %s526, 7
        %s528 = scalar_select %p527, %s526, 7
        %s529 = smul.addr %s528, 8
        %s530 = scalar_lea.vmem %s4, %s529
      $region52: #{gat_forward.6} parent=43 // pred_fallthru
        _
    $region44: #{gat_forward.6} parent=5 // pred_fallthru
      _
  $region6: #{gat_forward.6} parent=0 // loop_footer
    %s15 = sadd.s32 1, %s11
  $region7: #{gat_forward.6} parent=0 // loop_footer_branch
    %10 = sbr.rel target = $region3
  $region8: #{gat_forward.6} parent=0 // loop_exit
    _

// kernel: gat_forward.7
$region0: #{gat_forward.7}
  #allocation0 [shape = 'u32[]', space=smem, size = 0x4, offset = 0x4, fixed_abs, tag = 'smem constant byte address 0x4 - core index']
  #allocation1 [shape = 'u32[144,128]{1,0:T(1,128)}', space=vmem, size = 0x12000, scoped, tag = 'internal scratch']
  %s0 = inlined_call_operand.vmem [shape: f32[64,8], index: 0, kind: input, shape index: {}]
  %s1 = inlined_call_operand.vmem [shape: f32[8,64], index: 1, kind: input, shape index: {}]
  %s2 = inlined_call_operand.vmem [shape: bf16[64,128], index: 2, kind: input, shape index: {}]
  %s3 = inlined_call_operand.vmem [shape: s8[64,64], index: 3, kind: input, shape index: {}]
  %s4 = inlined_call_operand.vmem [shape: f32[64,128], index: 4, kind: output, shape index: {}]
  %s5 = sld [smem:[#allocation0]]
  $region49: #{gat_forward.7} parent=0
    _
  %s7 = ssub.s32 1, %s5
  %s8 = scalar_select 0, %s7, %s5
  loop: start=0, step=1, limit=4
  $region2: #{gat_forward.7} parent=0 // loop_pre_header
    _
  $region3: #{gat_forward.7} parent=0 // loop_header
    %s10 = sphi 0, %s14
    %p11 = scmp.ge.s32.totalorder %s10, 4
    %s20 = sphi 0, %s22
    %s23 = sphi 0, %s20
    %s24 = sphi 0, %s23
    %s40 = sphi 0, %s24
    %s44 = sphi 0, %s44
    %s46 = sphi 0, %s44
    %s47 = sphi 0, %s46
    %s61 = sphi 0, %s47
    %s65 = sphi 0, %s65
    %s67 = sphi 0, %s65
    %s68 = sphi 0, %s67
    %s82 = sphi 0, %s68
    %s88 = sphi 0, %s90
    %s91 = sphi 0, %s88
    %s92 = sphi 0, %s91
    %s108 = sphi 0, %s92
    %s114 = sphi 0, %s116
    %s117 = sphi 0, %s114
    %s118 = sphi 0, %s117
    %s134 = sphi 0, %s118
  $region4: #{gat_forward.7} parent=0 // loop_header_branch
    %13 = sbr.rel (%p11) target = $region8
  $region5: #{gat_forward.7} parent=0 // loop_body
    %s15 = ssub.s32 %s10, 1
    %s16 = ssub.s32 %s10, 2
    %s17 = sadd.s32 %s10, 1
    %s18 = ssub.s32 %s10, %s17
    %p19 = scmp.eq.s32.totalorder %s18, 0
    %s21 = sadd.s32 %s20, 1
    %s22 = scalar_select %p19, %s20, %s21
    %p25 = pneg %p19
    %p26 = scmp.eq.s32.totalorder %s10, 1
    %p27 = por %p25, %p26
    %p28 = scmp.ne.s32.totalorder %s20, %s23
    %p29 = scmp.eq.s32.totalorder %s10, 0
    %p30 = por %p28, %p29
    %p31 = scmp.ne.s32.totalorder %s20, %s23
    %p32 = scmp.eq.s32.totalorder %s15, 1
    %p33 = por %p31, %p32
    %p34 = scmp.ne.s32.totalorder %s23, %s24
    %p35 = scmp.eq.s32.totalorder %s15, 0
    %p36 = por %p34, %p35
    %p37 = scmp.ne.s32.totalorder %s23, %s24
    %p38 = scmp.eq.s32.totalorder %s16, 1
    %p39 = por %p37, %p38
    %p41 = scmp.ne.s32.totalorder %s24, %s40
    %p42 = scmp.eq.s32.totalorder %s16, 0
    %p43 = por %p41, %p42
    %s45 = sadd.s32 %s44, 1
    %p48 = scmp.eq.s32.totalorder %s10, 1
    %p49 = scmp.ne.s32.totalorder %s44, %s46
    %p50 = scmp.eq.s32.totalorder %s10, 0
    %p51 = por %p49, %p50
    %p52 = scmp.ne.s32.totalorder %s44, %s46
    %p53 = scmp.eq.s32.totalorder %s15, 1
    %p54 = por %p52, %p53
    %p55 = scmp.ne.s32.totalorder %s46, %s47
    %p56 = scmp.eq.s32.totalorder %s15, 0
    %p57 = por %p55, %p56
    %p58 = scmp.ne.s32.totalorder %s46, %s47
    %p59 = scmp.eq.s32.totalorder %s16, 1
    %p60 = por %p58, %p59
    %p62 = scmp.ne.s32.totalorder %s47, %s61
    %p63 = scmp.eq.s32.totalorder %s16, 0
    %p64 = por %p62, %p63
    %s66 = sadd.s32 %s65, 1
    %p69 = scmp.eq.s32.totalorder %s10, 1
    %p70 = scmp.ne.s32.totalorder %s65, %s67
    %p71 = scmp.eq.s32.totalorder %s10, 0
    %p72 = por %p70, %p71
    %p73 = scmp.ne.s32.totalorder %s65, %s67
    %p74 = scmp.eq.s32.totalorder %s15, 1
    %p75 = por %p73, %p74
    %p76 = scmp.ne.s32.totalorder %s67, %s68
    %p77 = scmp.eq.s32.totalorder %s15, 0
    %p78 = por %p76, %p77
    %p79 = scmp.ne.s32.totalorder %s67, %s68
    %p80 = scmp.eq.s32.totalorder %s16, 1
    %p81 = por %p79, %p80
    %p83 = scmp.ne.s32.totalorder %s68, %s82
    %p84 = scmp.eq.s32.totalorder %s16, 0
    %p85 = por %p83, %p84
    %s86 = ssub.s32 %s10, %s17
    %p87 = scmp.eq.s32.totalorder %s86, 0
    %s89 = sadd.s32 %s88, 1
    %s90 = scalar_select %p87, %s88, %s89
    %p93 = pneg %p87
    %p94 = scmp.eq.s32.totalorder %s10, 1
    %p95 = por %p93, %p94
    %p96 = scmp.ne.s32.totalorder %s88, %s91
    %p97 = scmp.eq.s32.totalorder %s10, 0
    %p98 = por %p96, %p97
    %p99 = scmp.ne.s32.totalorder %s88, %s91
    %p100 = scmp.eq.s32.totalorder %s15, 1
    %p101 = por %p99, %p100
    %p102 = scmp.ne.s32.totalorder %s91, %s92
    %p103 = scmp.eq.s32.totalorder %s15, 0
    %p104 = por %p102, %p103
    %p105 = scmp.ne.s32.totalorder %s91, %s92
    %p106 = scmp.eq.s32.totalorder %s16, 1
    %p107 = por %p105, %p106
    %p109 = scmp.ne.s32.totalorder %s92, %s108
    %p110 = scmp.eq.s32.totalorder %s16, 0
    %p111 = por %p109, %p110
    %s112 = ssub.s32 %s10, %s17
    %p113 = scmp.eq.s32.totalorder %s112, 0
    %s115 = sadd.s32 %s114, 1
    %s116 = scalar_select %p113, %s114, %s115
    %p119 = pneg %p113
    %p120 = scmp.eq.s32.totalorder %s10, 1
    %p121 = por %p119, %p120
    %p122 = scmp.ne.s32.totalorder %s114, %s117
    %p123 = scmp.eq.s32.totalorder %s10, 0
    %p124 = por %p122, %p123
    %p125 = scmp.ne.s32.totalorder %s114, %s117
    %p126 = scmp.eq.s32.totalorder %s15, 1
    %p127 = por %p125, %p126
    %p128 = scmp.ne.s32.totalorder %s117, %s118
    %p129 = scmp.eq.s32.totalorder %s15, 0
    %p130 = por %p128, %p129
    %p131 = scmp.ne.s32.totalorder %s117, %s118
    %p132 = scmp.eq.s32.totalorder %s16, 1
    %p133 = por %p131, %p132
    %p135 = scmp.ne.s32.totalorder %s118, %s134
    %p136 = scmp.eq.s32.totalorder %s16, 0
    %p137 = por %p135, %p136
    %p138 = scmp.le.s32.totalorder 1, %s10
    %p139 = scmp.lt.s32.totalorder %s10, 3
    %p140 = pnand %p138, %p139
    %p141 = pneg %p140
    // Predicated region
    $region9: #{gat_forward.7} parent=5 // pred_check
      _
    $region10: #{gat_forward.7} parent=5 // pred_check_branch
      %143 = sbr.rel (%p140) target = $region12
    $region11: #{gat_forward.7} parent=5 // pred_region
      %s144 = ssub.s32 %s10, 1
      // Predicated region
      $region13: #{gat_forward.7} parent=11 // pred_check
        %p145 = pneg %p57
      $region14: #{gat_forward.7} parent=11 // pred_check_branch
        %147 = sbr.rel (%p145) target = $region16
      $region15: #{gat_forward.7} parent=11 // pred_region
        _
      $region16: #{gat_forward.7} parent=11 // pred_fallthru
        _
      // Predicated region
      $region17: #{gat_forward.7} parent=11 // pred_check
        %p148 = pneg %p78
      $region18: #{gat_forward.7} parent=11 // pred_check_branch
        %150 = sbr.rel (%p148) target = $region20
      $region19: #{gat_forward.7} parent=11 // pred_region
        _
      $region20: #{gat_forward.7} parent=11 // pred_fallthru
        _
    $region12: #{gat_forward.7} parent=5 // pred_fallthru
      _
    %p151 = scmp.lt.s32.totalorder %s10, 2
    // Predicated region
    $region21: #{gat_forward.7} parent=5 // pred_check
      %p152 = pneg %p151
    $region22: #{gat_forward.7} parent=5 // pred_check_branch
      %154 = sbr.rel (%p152) target = $region24
    $region23: #{gat_forward.7} parent=5 // pred_region
      // Predicated region
      $region25: #{gat_forward.7} parent=23 // pred_check
        %p155 = pneg %p30
      $region26: #{gat_forward.7} parent=23 // pred_check_branch
        %157 = sbr.rel (%p155) target = $region28
      $region27: #{gat_forward.7} parent=23 // pred_region
        %s158 = smul.u32 4, %s10
        %p159 = scmp.lt.s32.totalorder %s158, 7
        %s160 = scalar_select %p159, %s158, 7
        %s161 = smul.addr %s160, 8
        %s162 = scalar_lea.vmem %s0, %s161
        %s163 = smul.u32 4, %s10
      $region28: #{gat_forward.7} parent=23 // pred_fallthru
        _
      // Predicated region
      $region29: #{gat_forward.7} parent=23 // pred_check
        %p164 = pneg %p98
      $region30: #{gat_forward.7} parent=23 // pred_check_branch
        %166 = sbr.rel (%p164) target = $region32
      $region31: #{gat_forward.7} parent=23 // pred_region
        %p167 = scmp.lt.s32.totalorder %s10, 1
        %s168 = scalar_select %p167, %s10, 1
        %s169 = smul.addr %s168, 8
        %s170 = scalar_lea.vmem %s3, %s169
      $region32: #{gat_forward.7} parent=23 // pred_fallthru
        _
    $region24: #{gat_forward.7} parent=5 // pred_fallthru
      _
    %p171 = scmp.le.s32.totalorder 1, %s10
    %p172 = scmp.lt.s32.totalorder %s10, 3
    %p173 = pnand %p171, %p172
    %p174 = pneg %p173
    // Predicated region
    $region33: #{gat_forward.7} parent=5 // pred_check
      _
    $region34: #{gat_forward.7} parent=5 // pred_check_branch
      %176 = sbr.rel (%p173) target = $region36
    $region35: #{gat_forward.7} parent=5 // pred_region
      %s177 = ssub.s32 %s10, 1
      %s178 = smul.u32 4, %s15
      %p179 = scmp.lt.s32.totalorder %s178, 7
      %s180 = scalar_select %p179, %s178, 7
      %s181 = smul.addr %s180, 8
      %s182 = scalar_lea.vmem %s0, %s181
      %p183 = pneg %p36
      %p184 = pneg %p33
      %p185 = pneg %p57
      %p186 = pneg %p54
      %p187 = pneg %p78
      %p188 = pneg %p75
      %p189 = scmp.lt.s32.totalorder %s15, 1
      %s190 = scalar_select %p189, %s15, 1
      %s191 = smul.addr %s190, 8
      %s192 = scalar_lea.vmem %s3, %s191
      %p193 = pneg %p104
      %p194 = pneg %p101
      %p195 = pneg %p130
      %p196 = pneg %p127
      %s197 = smul.u32 4, %s15
      %p198 = scmp.lt.s32.totalorder %s197, 7
      %s199 = scalar_select %p198, %s197, 7
      %s200 = smul.addr %s199, 8
      %s201 = scalar_lea.vmem %s4, %s200
      %s202 = smul.u32 4, %s15
      %p203 = scmp.lt.s32.totalorder %s202, 7
      %s204 = scalar_select %p203, %s202, 7
      %s205 = smul.addr %s204, 8
      %s206 = scalar_lea.vmem %s0, %s205
      %s207 = smul.u32 4, %s15
      %p208 = scmp.lt.s32.totalorder %s15, 1
      %s209 = scalar_select %p208, %s15, 1
      %s210 = smul.addr %s209, 8
      %s211 = scalar_lea.vmem %s3, %s210
      %s212 = smul.u32 4, %s15
      %p213 = scmp.lt.s32.totalorder %s212, 7
      %s214 = scalar_select %p213, %s212, 7
      %s215 = smul.addr %s214, 8
      %s216 = scalar_lea.vmem %s4, %s215
      %s217 = smul.u32 4, %s15
      %v219 = vld [vmem:[%s206] sm:$0xff]
      %v220 = vld [vmem:[%s206 + $0x8] sm:$0xff]
      %v221 = vld [vmem:[%s206 + $0x10] sm:$0xff]
      %v222 = vld [vmem:[%s206 + $0x18] sm:$0xff]
      %v223 = vld [vmem:[%s1] sm:$0xff]
      %v224 = vld [vmem:[%s2] sm:$0xf]
      %v225 = vld [vmem:[%s2 + $0x4] sm:$0xf]
      %v226 = vld [vmem:[%s2 + $0x8] sm:$0xf]
      %v227 = vld [vmem:[%s2 + $0xc] sm:$0xf]
      %v228 = vld [vmem:[%s2 + $0x10] sm:$0xf]
      %v229 = vld [vmem:[%s2 + $0x14] sm:$0xf]
      %v230 = vld [vmem:[%s2 + $0x18] sm:$0xf]
      %v231 = vld [vmem:[%s2 + $0x1c] sm:$0xf]
      %v232 = vld [vmem:[%s211] sm:$0xff]
      %v233 = vunpack.c.0.s8 %v232
      %v234 = vunpack.c.1.s8 %v232
      %v235 = vunpack.c.2.s8 %v232
      %v236 = vunpack.c.3.s8 %v232
      %v237 = vcvt.s32.f32 %v233
      %v238 = vcvt.s32.f32 %v234
      %v239 = vcvt.s32.f32 %v235
      %v240 = vcvt.s32.f32 %v236
      %v241 = vsub.f32 %v237, 1.0
      %v242 = vsub.f32 %v238, 1.0
      %v243 = vsub.f32 %v239, 1.0
      %v244 = vsub.f32 %v240, 1.0
      %v245 = vmul.f32 %v241, 1e+30
      %v246 = vmul.f32 %v242, 1e+30
      %v247 = vmul.f32 %v243, 1e+30
      %v248 = vmul.f32 %v244, 1e+30
      %v249 = vlaneseq
      %v250 = vand.u32 %v249, 127
      %252 = vset.pattern.permute.xlu0 0
      %253 = vperm.xlu0 %252, %v219
      %v254 = vpop.permute.xlu0 %253
      %257 = vset.pattern.permute.xlu0 0
      %258 = vperm.xlu0 %257, %v220
      %v259 = vpop.permute.xlu0 %258
      %262 = vset.pattern.permute.xlu0 0
      %263 = vperm.xlu0 %262, %v221
      %v264 = vpop.permute.xlu0 %263
      %267 = vset.pattern.permute.xlu0 0
      %268 = vperm.xlu0 %267, %v222
      %v269 = vpop.permute.xlu0 %268
      %v271 = vlaneseq
      %v272 = vshrl.u32 %v271, 7
      %v273 = vsub.s32 1, %v272
      %v274 = vrot.slane %v223, %v273
      %v275 = vadd.f32 %v254, %v274
      %v276 = vadd.f32 %v259, %v274
      %v277 = vadd.f32 %v264, %v274
      %v278 = vadd.f32 %v269, %v274
      %v279 = vmul.f32 %v275, 0.2
      %v280 = vmul.f32 %v276, 0.2
      %v281 = vmul.f32 %v277, 0.2
      %v282 = vmul.f32 %v278, 0.2
      %v283 = vmax.f32 %v275, %v279
      %v284 = vmax.f32 %v276, %v280
      %v285 = vmax.f32 %v277, %v281
      %v286 = vmax.f32 %v278, %v282
      %v287 = vadd.f32 %v283, %v245
      %v288 = vadd.f32 %v284, %v246
      %v289 = vadd.f32 %v285, %v247
      %v290 = vadd.f32 %v286, %v248
      %vm291 = vcmask 523264
      %v292 = vsel %vm291, %v287, -inf
      %293 = vmax.xlane.f32.xlu0 %v292
      %v294 = vpop.xlane.xlu0 %293
      %v295 = vsel %vm291, %v288, -inf
      %296 = vmax.xlane.f32.xlu0 %v295
      %v297 = vpop.xlane.xlu0 %296
      %v298 = vsel %vm291, %v289, -inf
      %299 = vmax.xlane.f32.xlu0 %v298
      %v300 = vpop.xlane.xlu0 %299
      %v301 = vsel %vm291, %v290, -inf
      %302 = vmax.xlane.f32.xlu0 %v301
      %v303 = vpop.xlane.xlu0 %302
      %v304 = vsub.f32 %v287, %v294
      %v305 = vsub.f32 %v288, %v297
      %v306 = vsub.f32 %v289, %v300
      %v307 = vsub.f32 %v290, %v303
      %v308 = vpack.c.bf16 %v305, %v304
      %v309 = vpack.c.bf16 %v307, %v306
      %v311 = vmul.bf16 %v308, 1069105081
      %v312 = vpow.bf16.pop %v311
      %v314 = vmul.bf16 %v309, 1069105081
      %v315 = vpow.bf16.pop %v314
      %v324 = vunpack.c.l.b16 %v224
      %v325 = vunpack.c.l.b16 %v225
      %v326 = vunpack.c.l.b16 %v226
      %v327 = vunpack.c.l.b16 %v227
      %v328 = vunpack.c.l.b16 %v228
      %v329 = vunpack.c.l.b16 %v229
      %v330 = vunpack.c.l.b16 %v230
      %v331 = vunpack.c.l.b16 %v231
      %v332 = vpack.c.b16 %v325, %v324
      %v333 = vpack.c.b16 %v327, %v326
      %v334 = vpack.c.b16 %v329, %v328
      %v335 = vpack.c.b16 %v331, %v330
      %v341 = vsel %vm291, %v312, 0
      %v344 = vsel %vm291, %v315, 0
      %346 = vmatprep.subr.bf16.mxu0 0
      %347 = vmatpush1.bf16.msra.mxu0 %v332
      %348 = vmatprep.subr.bf16.mxu0 0
      %349 = vmatpush1.bf16.msra.mxu0 %v333
      %350 = vmatprep.subr.bf16.mxu0 0
      %351 = vmatpush1.bf16.msra.mxu0 %v334
      %352 = vmatprep.subr.bf16.mxu0 0
      %353 = vmatpush1.bf16.msra.mxu0 %v335
      %354 = vmatprep.subr.bf16.mxu0 0
      %355 = vmatpush1.bf16.msra.mxu0 0
      %356 = vmatprep.subr.bf16.mxu0 0
      %357 = vmatpush1.bf16.msra.mxu0 0
      %358 = vmatprep.subr.bf16.mxu0 0
      %359 = vmatpush1.bf16.msra.mxu0 0
      %360 = vmatprep.subr.bf16.mxu0 0
      %361 = vmatpush1.bf16.msra.mxu0 0
      %362 = vmatprep.subr.bf16.mxu0 0
      %363 = vmatpush1.bf16.msra.mxu0 0
      %364 = vmatprep.subr.bf16.mxu0 0
      %365 = vmatpush1.bf16.msra.mxu0 0
      %366 = vmatprep.subr.bf16.mxu0 0
      %367 = vmatpush1.bf16.msra.mxu0 0
      %368 = vmatprep.subr.bf16.mxu0 0
      %369 = vmatpush1.bf16.msra.mxu0 0
      %370 = vmatprep.subr.bf16.mxu0 0
      %371 = vmatpush1.bf16.msra.mxu0 0
      %372 = vmatprep.subr.bf16.mxu0 0
      %373 = vmatpush1.bf16.msra.mxu0 0
      %374 = vmatprep.subr.bf16.mxu0 0
      %375 = vmatpush1.bf16.msra.mxu0 0
      %376 = vmatprep.subr.bf16.mxu0 0
      %377 = vmatpush1.bf16.msra.mxu0 0
      %378 = vmatprep.mubr.bf16.mxu0 0
      %379 = vmatmul.mubr.bf16.gmra.mrb[0].mxu0 %v341
      %v380 = vpop.f32.mrb[0].mxu0
      %v381 = vadd.f32 0.0, %v380
      %v382 = vpop.f32.mrb[0].mxu0
      %v383 = vpop.f32.mrb[0].mxu0
      %v384 = vadd.f32 0.0, %v383
      %v385 = vpop.f32.mrb[0].mxu0
      %386 = vmatprep.mubr.bf16.mxu0 0
      %387 = vmatmul.mubr.bf16.gmra.mrb[0].mxu0 %v344
      %v388 = vpop.f32.mrb[0].mxu0
      %v389 = vadd.f32 0.0, %v388
      %v390 = vpop.f32.mrb[0].mxu0
      %v391 = vpop.f32.mrb[0].mxu0
      %v392 = vadd.f32 0.0, %v391
      %v393 = vpop.f32.mrb[0].mxu0
      %394 = vdwg.mxu0
      %v395 = vrcp.pop %v381
      %v396 = vrcp.pop %v384
      %v397 = vrcp.pop %v389
      %v398 = vrcp.pop %v392
      %400 = vset.pattern.permute.xlu0 8
      %401 = vperm.xlu0 %400, %v395
      %v402 = vpop.permute.xlu0 %401
      %405 = vset.pattern.permute.xlu0 8
      %406 = vperm.xlu0 %405, %v396
      %v407 = vpop.permute.xlu0 %406
      %410 = vset.pattern.permute.xlu0 8
      %411 = vperm.xlu0 %410, %v397
      %v412 = vpop.permute.xlu0 %411
      %415 = vset.pattern.permute.xlu0 8
      %416 = vperm.xlu0 %415, %v398
      %v417 = vpop.permute.xlu0 %416
      %v419 = vmul.f32 %v381, %v402
      %v420 = vmul.f32 %v384, %v407
      %v421 = vmul.f32 %v389, %v412
      %v422 = vmul.f32 %v392, %v417
      %vm423 = vcmp.ge.s32.totalorder %v250, 0
      %vm424 = vcmp.lt.s32.totalorder %v250, 8
      %vm425 = vmand %vm423, %vm424
      %v426 = vsel %vm425, %v419, 0.0
      %v427 = vsel %vm425, %v420, 0.0
      %v428 = vsel %vm425, %v421, 0.0
      %v429 = vsel %vm425, %v422, 0.0
      %430 = vst [vmem:[%s216] sm:$0xff] %v426
      %431 = vst [vmem:[%s216 + $0x8] sm:$0xff] %v427
      %432 = vst [vmem:[%s216 + $0x10] sm:$0xff] %v428
      %433 = vst [vmem:[%s216 + $0x18] sm:$0xff] %v429
      %s434 = smul.u32 4, %s15
      %p435 = scmp.lt.s32.totalorder %s434, 7
      %s436 = scalar_select %p435, %s434, 7
      %s437 = smul.addr %s436, 8
      %s438 = scalar_lea.vmem %s4, %s437
      // Predicated region
      $region37: #{gat_forward.7} parent=35 // pred_check
        %p439 = pneg %p127
      $region38: #{gat_forward.7} parent=35 // pred_check_branch
        %441 = sbr.rel (%p439) target = $region40
      $region39: #{gat_forward.7} parent=35 // pred_region
        %s442 = smul.u32 4, %s15
      $region40: #{gat_forward.7} parent=35 // pred_fallthru
        _
    $region36: #{gat_forward.7} parent=5 // pred_fallthru
      _
    %p443 = scmp.le.s32.totalorder 2, %s10
    // Predicated region
    $region41: #{gat_forward.7} parent=5 // pred_check
      %p444 = pneg %p443
    $region42: #{gat_forward.7} parent=5 // pred_check_branch
      %446 = sbr.rel (%p444) target = $region44
    $region43: #{gat_forward.7} parent=5 // pred_region
      %s447 = ssub.s32 %s10, 2
      // Predicated region
      $region45: #{gat_forward.7} parent=43 // pred_check
        %p448 = pneg %p133
      $region46: #{gat_forward.7} parent=43 // pred_check_branch
        %450 = sbr.rel (%p448) target = $region48
      $region47: #{gat_forward.7} parent=43 // pred_region
        %s451 = smul.u32 4, %s16
        %p452 = scmp.lt.s32.totalorder %s451, 7
        %s453 = scalar_select %p452, %s451, 7
        %s454 = smul.addr %s453, 8
        %s455 = scalar_lea.vmem %s4, %s454
      $region48: #{gat_forward.7} parent=43 // pred_fallthru
        _
    $region44: #{gat_forward.7} parent=5 // pred_fallthru
      _
  $region6: #{gat_forward.7} parent=0 // loop_footer
    %s14 = sadd.s32 1, %s10
  $region7: #{gat_forward.7} parent=0 // loop_footer_branch
    %9 = sbr.rel target = $region3
  $region8: #{gat_forward.7} parent=0 // loop_exit
    _

// kernel: gat_forward.4
$region0: #{gat_forward.4}
  #allocation0 [shape = 'u32[]', space=smem, size = 0x4, offset = 0x4, fixed_abs, tag = 'smem constant byte address 0x4 - core index']
  #allocation1 [shape = 'u32[144,128]{1,0:T(1,128)}', space=vmem, size = 0x12000, scoped, tag = 'internal scratch']
  %s0 = inlined_call_operand.vmem [shape: bf16[64,128], index: 0, kind: input, shape index: {}]
  %s1 = inlined_call_operand.vmem [shape: bf16[128,128], index: 1, kind: input, shape index: {}]
  %s2 = inlined_call_operand.vmem [shape: bf16[128,8], index: 2, kind: input, shape index: {}]
  %s3 = inlined_call_operand.vmem [shape: bf16[64,128], index: 3, kind: output, shape index: {0}]
  %s4 = inlined_call_operand.vmem [shape: f32[64,8], index: 4, kind: output, shape index: {1}]
  %5 = xla_tuple %s3, %s4
  %s6 = sld [smem:[#allocation0]]
  $region53: #{gat_forward.4} parent=0
    _
  %s8 = ssub.s32 1, %s6
  %s9 = scalar_select 0, %s8, %s6
  loop: start=0, step=1, limit=4
  $region2: #{gat_forward.4} parent=0 // loop_pre_header
    _
  $region3: #{gat_forward.4} parent=0 // loop_header
    %s11 = sphi 0, %s15
    %p12 = scmp.ge.s32.totalorder %s11, 4
    %s21 = sphi 0, %s23
    %s24 = sphi 0, %s21
    %s25 = sphi 0, %s24
    %s41 = sphi 0, %s25
    %s45 = sphi 0, %s45
    %s47 = sphi 0, %s45
    %s48 = sphi 0, %s47
    %s62 = sphi 0, %s48
    %s66 = sphi 0, %s66
    %s68 = sphi 0, %s66
    %s69 = sphi 0, %s68
    %s83 = sphi 0, %s69
    %s89 = sphi 0, %s91
    %s92 = sphi 0, %s89
    %s93 = sphi 0, %s92
    %s109 = sphi 0, %s93
    %s115 = sphi 0, %s117
    %s118 = sphi 0, %s115
    %s119 = sphi 0, %s118
    %s135 = sphi 0, %s119
  $region4: #{gat_forward.4} parent=0 // loop_header_branch
    %14 = sbr.rel (%p12) target = $region8
  $region5: #{gat_forward.4} parent=0 // loop_body
    %s16 = ssub.s32 %s11, 1
    %s17 = ssub.s32 %s11, 2
    %s18 = sadd.s32 %s11, 1
    %s19 = ssub.s32 %s11, %s18
    %p20 = scmp.eq.s32.totalorder %s19, 0
    %s22 = sadd.s32 %s21, 1
    %s23 = scalar_select %p20, %s21, %s22
    %p26 = pneg %p20
    %p27 = scmp.eq.s32.totalorder %s11, 1
    %p28 = por %p26, %p27
    %p29 = scmp.ne.s32.totalorder %s21, %s24
    %p30 = scmp.eq.s32.totalorder %s11, 0
    %p31 = por %p29, %p30
    %p32 = scmp.ne.s32.totalorder %s21, %s24
    %p33 = scmp.eq.s32.totalorder %s16, 1
    %p34 = por %p32, %p33
    %p35 = scmp.ne.s32.totalorder %s24, %s25
    %p36 = scmp.eq.s32.totalorder %s16, 0
    %p37 = por %p35, %p36
    %p38 = scmp.ne.s32.totalorder %s24, %s25
    %p39 = scmp.eq.s32.totalorder %s17, 1
    %p40 = por %p38, %p39
    %p42 = scmp.ne.s32.totalorder %s25, %s41
    %p43 = scmp.eq.s32.totalorder %s17, 0
    %p44 = por %p42, %p43
    %s46 = sadd.s32 %s45, 1
    %p49 = scmp.eq.s32.totalorder %s11, 1
    %p50 = scmp.ne.s32.totalorder %s45, %s47
    %p51 = scmp.eq.s32.totalorder %s11, 0
    %p52 = por %p50, %p51
    %p53 = scmp.ne.s32.totalorder %s45, %s47
    %p54 = scmp.eq.s32.totalorder %s16, 1
    %p55 = por %p53, %p54
    %p56 = scmp.ne.s32.totalorder %s47, %s48
    %p57 = scmp.eq.s32.totalorder %s16, 0
    %p58 = por %p56, %p57
    %p59 = scmp.ne.s32.totalorder %s47, %s48
    %p60 = scmp.eq.s32.totalorder %s17, 1
    %p61 = por %p59, %p60
    %p63 = scmp.ne.s32.totalorder %s48, %s62
    %p64 = scmp.eq.s32.totalorder %s17, 0
    %p65 = por %p63, %p64
    %s67 = sadd.s32 %s66, 1
    %p70 = scmp.eq.s32.totalorder %s11, 1
    %p71 = scmp.ne.s32.totalorder %s66, %s68
    %p72 = scmp.eq.s32.totalorder %s11, 0
    %p73 = por %p71, %p72
    %p74 = scmp.ne.s32.totalorder %s66, %s68
    %p75 = scmp.eq.s32.totalorder %s16, 1
    %p76 = por %p74, %p75
    %p77 = scmp.ne.s32.totalorder %s68, %s69
    %p78 = scmp.eq.s32.totalorder %s16, 0
    %p79 = por %p77, %p78
    %p80 = scmp.ne.s32.totalorder %s68, %s69
    %p81 = scmp.eq.s32.totalorder %s17, 1
    %p82 = por %p80, %p81
    %p84 = scmp.ne.s32.totalorder %s69, %s83
    %p85 = scmp.eq.s32.totalorder %s17, 0
    %p86 = por %p84, %p85
    %s87 = ssub.s32 %s11, %s18
    %p88 = scmp.eq.s32.totalorder %s87, 0
    %s90 = sadd.s32 %s89, 1
    %s91 = scalar_select %p88, %s89, %s90
    %p94 = pneg %p88
    %p95 = scmp.eq.s32.totalorder %s11, 1
    %p96 = por %p94, %p95
    %p97 = scmp.ne.s32.totalorder %s89, %s92
    %p98 = scmp.eq.s32.totalorder %s11, 0
    %p99 = por %p97, %p98
    %p100 = scmp.ne.s32.totalorder %s89, %s92
    %p101 = scmp.eq.s32.totalorder %s16, 1
    %p102 = por %p100, %p101
    %p103 = scmp.ne.s32.totalorder %s92, %s93
    %p104 = scmp.eq.s32.totalorder %s16, 0
    %p105 = por %p103, %p104
    %p106 = scmp.ne.s32.totalorder %s92, %s93
    %p107 = scmp.eq.s32.totalorder %s17, 1
    %p108 = por %p106, %p107
    %p110 = scmp.ne.s32.totalorder %s93, %s109
    %p111 = scmp.eq.s32.totalorder %s17, 0
    %p112 = por %p110, %p111
    %s113 = ssub.s32 %s11, %s18
    %p114 = scmp.eq.s32.totalorder %s113, 0
    %s116 = sadd.s32 %s115, 1
    %s117 = scalar_select %p114, %s115, %s116
    %p120 = pneg %p114
    %p121 = scmp.eq.s32.totalorder %s11, 1
    %p122 = por %p120, %p121
    %p123 = scmp.ne.s32.totalorder %s115, %s118
    %p124 = scmp.eq.s32.totalorder %s11, 0
    %p125 = por %p123, %p124
    %p126 = scmp.ne.s32.totalorder %s115, %s118
    %p127 = scmp.eq.s32.totalorder %s16, 1
    %p128 = por %p126, %p127
    %p129 = scmp.ne.s32.totalorder %s118, %s119
    %p130 = scmp.eq.s32.totalorder %s16, 0
    %p131 = por %p129, %p130
    %p132 = scmp.ne.s32.totalorder %s118, %s119
    %p133 = scmp.eq.s32.totalorder %s17, 1
    %p134 = por %p132, %p133
    %p136 = scmp.ne.s32.totalorder %s119, %s135
    %p137 = scmp.eq.s32.totalorder %s17, 0
    %p138 = por %p136, %p137
    %p139 = scmp.le.s32.totalorder 1, %s11
    %p140 = scmp.lt.s32.totalorder %s11, 3
    %p141 = pnand %p139, %p140
    %p142 = pneg %p141
    // Predicated region
    $region9: #{gat_forward.4} parent=5 // pred_check
      _
    $region10: #{gat_forward.4} parent=5 // pred_check_branch
      %144 = sbr.rel (%p141) target = $region12
    $region11: #{gat_forward.4} parent=5 // pred_region
      %s145 = ssub.s32 %s11, 1
      // Predicated region
      $region13: #{gat_forward.4} parent=11 // pred_check
        %p146 = pneg %p58
      $region14: #{gat_forward.4} parent=11 // pred_check_branch
        %148 = sbr.rel (%p146) target = $region16
      $region15: #{gat_forward.4} parent=11 // pred_region
        _
      $region16: #{gat_forward.4} parent=11 // pred_fallthru
        _
      // Predicated region
      $region17: #{gat_forward.4} parent=11 // pred_check
        %p149 = pneg %p79
      $region18: #{gat_forward.4} parent=11 // pred_check_branch
        %151 = sbr.rel (%p149) target = $region20
      $region19: #{gat_forward.4} parent=11 // pred_region
        _
      $region20: #{gat_forward.4} parent=11 // pred_fallthru
        _
    $region12: #{gat_forward.4} parent=5 // pred_fallthru
      _
    %p152 = scmp.lt.s32.totalorder %s11, 2
    // Predicated region
    $region21: #{gat_forward.4} parent=5 // pred_check
      %p153 = pneg %p152
    $region22: #{gat_forward.4} parent=5 // pred_check_branch
      %155 = sbr.rel (%p153) target = $region24
    $region23: #{gat_forward.4} parent=5 // pred_region
      // Predicated region
      $region25: #{gat_forward.4} parent=23 // pred_check
        %p156 = pneg %p31
      $region26: #{gat_forward.4} parent=23 // pred_check_branch
        %158 = sbr.rel (%p156) target = $region28
      $region27: #{gat_forward.4} parent=23 // pred_region
        %s159 = smul.u32 4, %s11
        %p160 = scmp.lt.s32.totalorder %s159, 7
        %s161 = scalar_select %p160, %s159, 7
        %s162 = smul.addr %s161, 4
        %s163 = scalar_lea.vmem %s0, %s162
        %s164 = smul.u32 4, %s11
      $region28: #{gat_forward.4} parent=23 // pred_fallthru
        _
    $region24: #{gat_forward.4} parent=5 // pred_fallthru
      _
    %p165 = scmp.le.s32.totalorder 1, %s11
    %p166 = scmp.lt.s32.totalorder %s11, 3
    %p167 = pnand %p165, %p166
    %p168 = pneg %p167
    // Predicated region
    $region29: #{gat_forward.4} parent=5 // pred_check
      _
    $region30: #{gat_forward.4} parent=5 // pred_check_branch
      %170 = sbr.rel (%p167) target = $region32
    $region31: #{gat_forward.4} parent=5 // pred_region
      %s171 = ssub.s32 %s11, 1
      %s172 = smul.u32 4, %s16
      %p173 = scmp.lt.s32.totalorder %s172, 7
      %s174 = scalar_select %p173, %s172, 7
      %s175 = smul.addr %s174, 4
      %s176 = scalar_lea.vmem %s0, %s175
      %p177 = pneg %p37
      %p178 = pneg %p34
      %p179 = pneg %p58
      %p180 = pneg %p55
      %p181 = pneg %p79
      %p182 = pneg %p76
      %p183 = pneg %p105
      %p184 = pneg %p102
      %s185 = smul.u32 4, %s16
      %p186 = scmp.lt.s32.totalorder %s185, 7
      %s187 = scalar_select %p186, %s185, 7
      %s188 = smul.addr %s187, 4
      %s189 = scalar_lea.vmem %s3, %s188
      %p190 = pneg %p131
      %p191 = pneg %p128
      %s192 = smul.u32 4, %s16
      %p193 = scmp.lt.s32.totalorder %s192, 7
      %s194 = scalar_select %p193, %s192, 7
      %s195 = smul.addr %s194, 8
      %s196 = scalar_lea.vmem %s4, %s195
      %s197 = smul.u32 4, %s16
      %p198 = scmp.lt.s32.totalorder %s197, 7
      %s199 = scalar_select %p198, %s197, 7
      %s200 = smul.addr %s199, 4
      %s201 = scalar_lea.vmem %s0, %s200
      %s202 = smul.u32 4, %s16
      %s203 = smul.u32 4, %s16
      %p204 = scmp.lt.s32.totalorder %s203, 7
      %s205 = scalar_select %p204, %s203, 7
      %s206 = smul.addr %s205, 4
      %s207 = scalar_lea.vmem %s3, %s206
      %s208 = smul.u32 4, %s16
      %s209 = smul.u32 4, %s16
      %p210 = scmp.lt.s32.totalorder %s209, 7
      %s211 = scalar_select %p210, %s209, 7
      %s212 = smul.addr %s211, 8
      %s213 = scalar_lea.vmem %s4, %s212
      %s214 = smul.u32 4, %s16
      %v216 = vld [vmem:[%s201] sm:$0xf]
      %v217 = vld [vmem:[%s201 + $0x4] sm:$0xf]
      %v218 = vld [vmem:[%s201 + $0x8] sm:$0xf]
      %v219 = vld [vmem:[%s201 + $0xc] sm:$0xf]
      %v220 = vld [vmem:[%s1] sm:$0xf]
      %v221 = vld [vmem:[%s1 + $0x4] sm:$0xf]
      %v222 = vld [vmem:[%s1 + $0x8] sm:$0xf]
      %v223 = vld [vmem:[%s1 + $0xc] sm:$0xf]
      %v224 = vld [vmem:[%s1 + $0x10] sm:$0xf]
      %v225 = vld [vmem:[%s1 + $0x14] sm:$0xf]
      %v226 = vld [vmem:[%s1 + $0x18] sm:$0xf]
      %v227 = vld [vmem:[%s1 + $0x1c] sm:$0xf]
      %v228 = vld [vmem:[%s1 + $0x20] sm:$0xf]
      %v229 = vld [vmem:[%s1 + $0x24] sm:$0xf]
      %v230 = vld [vmem:[%s1 + $0x28] sm:$0xf]
      %v231 = vld [vmem:[%s1 + $0x2c] sm:$0xf]
      %v232 = vld [vmem:[%s1 + $0x30] sm:$0xf]
      %v233 = vld [vmem:[%s1 + $0x34] sm:$0xf]
      %v234 = vld [vmem:[%s1 + $0x38] sm:$0xf]
      %v235 = vld [vmem:[%s1 + $0x3c] sm:$0xf]
      %v240 = vunpack.c.l.b16 %v216
      %v241 = vunpack.c.l.b16 %v217
      %v242 = vunpack.c.l.b16 %v218
      %v243 = vunpack.c.l.b16 %v219
      %v244 = vpack.c.b16 %v241, %v240
      %v245 = vpack.c.b16 %v243, %v242
      %v264 = vunpack.c.l.b16 %v220
      %v265 = vunpack.c.l.b16 %v221
      %v266 = vunpack.c.l.b16 %v222
      %v267 = vunpack.c.l.b16 %v223
      %v268 = vunpack.c.l.b16 %v224
      %v269 = vunpack.c.l.b16 %v225
      %v270 = vunpack.c.l.b16 %v226
      %v271 = vunpack.c.l.b16 %v227
      %v272 = vunpack.c.l.b16 %v228
      %v273 = vunpack.c.l.b16 %v229
      %v274 = vunpack.c.l.b16 %v230
      %v275 = vunpack.c.l.b16 %v231
      %v276 = vunpack.c.l.b16 %v232
      %v277 = vunpack.c.l.b16 %v233
      %v278 = vunpack.c.l.b16 %v234
      %v279 = vunpack.c.l.b16 %v235
      %v280 = vpack.c.b16 %v265, %v264
      %v281 = vpack.c.b16 %v267, %v266
      %v282 = vpack.c.b16 %v269, %v268
      %v283 = vpack.c.b16 %v271, %v270
      %v284 = vpack.c.b16 %v273, %v272
      %v285 = vpack.c.b16 %v275, %v274
      %v286 = vpack.c.b16 %v277, %v276
      %v287 = vpack.c.b16 %v279, %v278
      %296 = vmatprep.subr.bf16.mxu0 0
      %297 = vmatpush1.bf16.msra.mxu0 %v280
      %298 = vmatprep.subr.bf16.mxu0 0
      %299 = vmatpush1.bf16.msra.mxu0 %v281
      %300 = vmatprep.subr.bf16.mxu0 0
      %301 = vmatpush1.bf16.msra.mxu0 %v282
      %302 = vmatprep.subr.bf16.mxu0 0
      %303 = vmatpush1.bf16.msra.mxu0 %v283
      %304 = vmatprep.subr.bf16.mxu0 0
      %305 = vmatpush1.bf16.msra.mxu0 %v284
      %306 = vmatprep.subr.bf16.mxu0 0
      %307 = vmatpush1.bf16.msra.mxu0 %v285
      %308 = vmatprep.subr.bf16.mxu0 0
      %309 = vmatpush1.bf16.msra.mxu0 %v286
      %310 = vmatprep.subr.bf16.mxu0 0
      %311 = vmatpush1.bf16.msra.mxu0 %v287
      %312 = vmatprep.subr.bf16.mxu0 0
      %313 = vmatpush1.bf16.msra.mxu0 0
      %314 = vmatprep.subr.bf16.mxu0 0
      %315 = vmatpush1.bf16.msra.mxu0 0
      %316 = vmatprep.subr.bf16.mxu0 0
      %317 = vmatpush1.bf16.msra.mxu0 0
      %318 = vmatprep.subr.bf16.mxu0 0
      %319 = vmatpush1.bf16.msra.mxu0 0
      %320 = vmatprep.subr.bf16.mxu0 0
      %321 = vmatpush1.bf16.msra.mxu0 0
      %322 = vmatprep.subr.bf16.mxu0 0
      %323 = vmatpush1.bf16.msra.mxu0 0
      %324 = vmatprep.subr.bf16.mxu0 0
      %325 = vmatpush1.bf16.msra.mxu0 0
      %326 = vmatprep.subr.bf16.mxu0 0
      %327 = vmatpush1.bf16.msra.mxu0 0
      %328 = vmatprep.mubr.bf16.mxu0 0
      %329 = vmatmul.mubr.bf16.gmra.mrb[0].mxu0 %v244
      %v330 = vpop.f32.mrb[0].mxu0
      %v331 = vadd.f32 0.0, %v330
      %v332 = vpop.f32.mrb[0].mxu0
      %v333 = vpop.f32.mrb[0].mxu0
      %v334 = vadd.f32 0.0, %v333
      %v335 = vpop.f32.mrb[0].mxu0
      %336 = vmatprep.mubr.bf16.mxu0 0
      %337 = vmatmul.mubr.bf16.gmra.mrb[0].mxu0 %v245
      %v338 = vpop.f32.mrb[0].mxu0
      %v339 = vadd.f32 0.0, %v338
      %v340 = vpop.f32.mrb[0].mxu0
      %v341 = vpop.f32.mrb[0].mxu0
      %v342 = vadd.f32 0.0, %v341
      %v343 = vpop.f32.mrb[0].mxu0
      %344 = vdwg.mxu0
      %v345 = vpack.c.bf16 %v334, %v331
      %v346 = vpack.c.bf16 %v342, %v339
      %v347 = vld [vmem:[%s2] sm:$0xf]
      %v348 = vld [vmem:[%s2 + $0x4] sm:$0xf]
      %v349 = vld [vmem:[%s2 + $0x8] sm:$0xf]
      %v350 = vld [vmem:[%s2 + $0xc] sm:$0xf]
      %v351 = vld [vmem:[%s2 + $0x10] sm:$0xf]
      %v352 = vld [vmem:[%s2 + $0x14] sm:$0xf]
      %v353 = vld [vmem:[%s2 + $0x18] sm:$0xf]
      %v354 = vld [vmem:[%s2 + $0x1c] sm:$0xf]
      %v355 = vld [vmem:[%s2 + $0x20] sm:$0xf]
      %v356 = vld [vmem:[%s2 + $0x24] sm:$0xf]
      %v357 = vld [vmem:[%s2 + $0x28] sm:$0xf]
      %v358 = vld [vmem:[%s2 + $0x2c] sm:$0xf]
      %v359 = vld [vmem:[%s2 + $0x30] sm:$0xf]
      %v360 = vld [vmem:[%s2 + $0x34] sm:$0xf]
      %v361 = vld [vmem:[%s2 + $0x38] sm:$0xf]
      %v362 = vld [vmem:[%s2 + $0x3c] sm:$0xf]
      %v379 = vunpack.c.l.b16 %v347
      %v380 = vunpack.c.l.b16 %v348
      %v381 = vunpack.c.l.b16 %v349
      %v382 = vunpack.c.l.b16 %v350
      %v383 = vunpack.c.l.b16 %v351
      %v384 = vunpack.c.l.b16 %v352
      %v385 = vunpack.c.l.b16 %v353
      %v386 = vunpack.c.l.b16 %v354
      %v387 = vunpack.c.l.b16 %v355
      %v388 = vunpack.c.l.b16 %v356
      %v389 = vunpack.c.l.b16 %v357
      %v390 = vunpack.c.l.b16 %v358
      %v391 = vunpack.c.l.b16 %v359
      %v392 = vunpack.c.l.b16 %v360
      %v393 = vunpack.c.l.b16 %v361
      %v394 = vunpack.c.l.b16 %v362
      %v395 = vpack.c.b16 %v380, %v379
      %v396 = vpack.c.b16 %v382, %v381
      %v397 = vpack.c.b16 %v384, %v383
      %v398 = vpack.c.b16 %v386, %v385
      %v399 = vpack.c.b16 %v388, %v387
      %v400 = vpack.c.b16 %v390, %v389
      %v401 = vpack.c.b16 %v392, %v391
      %v402 = vpack.c.b16 %v394, %v393
      %411 = vmatprep.subr.bf16.mxu0 0
      %412 = vmatpush1.bf16.msra.mxu0 %v395
      %413 = vmatprep.subr.bf16.mxu0 0
      %414 = vmatpush1.bf16.msra.mxu0 %v396
      %415 = vmatprep.subr.bf16.mxu0 0
      %416 = vmatpush1.bf16.msra.mxu0 %v397
      %417 = vmatprep.subr.bf16.mxu0 0
      %418 = vmatpush1.bf16.msra.mxu0 %v398
      %419 = vmatprep.subr.bf16.mxu0 0
      %420 = vmatpush1.bf16.msra.mxu0 %v399
      %421 = vmatprep.subr.bf16.mxu0 0
      %422 = vmatpush1.bf16.msra.mxu0 %v400
      %423 = vmatprep.subr.bf16.mxu0 0
      %424 = vmatpush1.bf16.msra.mxu0 %v401
      %425 = vmatprep.subr.bf16.mxu0 0
      %426 = vmatpush1.bf16.msra.mxu0 %v402
      %427 = vmatprep.subr.bf16.mxu0 0
      %428 = vmatpush1.bf16.msra.mxu0 0
      %429 = vmatprep.subr.bf16.mxu0 0
      %430 = vmatpush1.bf16.msra.mxu0 0
      %431 = vmatprep.subr.bf16.mxu0 0
      %432 = vmatpush1.bf16.msra.mxu0 0
      %433 = vmatprep.subr.bf16.mxu0 0
      %434 = vmatpush1.bf16.msra.mxu0 0
      %435 = vmatprep.subr.bf16.mxu0 0
      %436 = vmatpush1.bf16.msra.mxu0 0
      %437 = vmatprep.subr.bf16.mxu0 0
      %438 = vmatpush1.bf16.msra.mxu0 0
      %439 = vmatprep.subr.bf16.mxu0 0
      %440 = vmatpush1.bf16.msra.mxu0 0
      %441 = vmatprep.subr.bf16.mxu0 0
      %442 = vmatpush1.bf16.msra.mxu0 0
      %443 = vmatprep.mubr.bf16.mxu0 0
      %444 = vmatmul.mubr.bf16.gmra.mrb[0].mxu0 %v345
      %v445 = vpop.f32.mrb[0].mxu0
      %v446 = vadd.f32 0.0, %v445
      %v447 = vpop.f32.mrb[0].mxu0
      %v448 = vpop.f32.mrb[0].mxu0
      %v449 = vadd.f32 0.0, %v448
      %v450 = vpop.f32.mrb[0].mxu0
      %451 = vmatprep.mubr.bf16.mxu0 0
      %452 = vmatmul.mubr.bf16.gmra.mrb[0].mxu0 %v346
      %v453 = vpop.f32.mrb[0].mxu0
      %v454 = vadd.f32 0.0, %v453
      %v455 = vpop.f32.mrb[0].mxu0
      %v456 = vpop.f32.mrb[0].mxu0
      %v457 = vadd.f32 0.0, %v456
      %v458 = vpop.f32.mrb[0].mxu0
      %459 = vdwg.mxu0
      %vm460 = vcmask 64512
      %461 = vst.msk [vmem:[%s213] sm:$0xff] %vm460, %v446
      %462 = vst.msk [vmem:[%s213 + $0x8] sm:$0xff] %vm460, %v449
      %463 = vst.msk [vmem:[%s213 + $0x10] sm:$0xff] %vm460, %v454
      %464 = vst.msk [vmem:[%s213 + $0x18] sm:$0xff] %vm460, %v457
      %v465 = vlaneseq
      %v466 = vand.u32 %v465, 127
      %vm467 = vcmp.eq.s32.totalorder %v466, 32
      %v468 = vsel %vm467, 1.0, %v331
      %v469 = vsel %vm467, 1.0, %v334
      %v470 = vsel %vm467, 1.0, %v339
      %v471 = vsel %vm467, 1.0, %v342
      %v472 = vpack.c.bf16 %v469, %v468
      %v473 = vpack.c.bf16 %v471, %v470
      %v476 = vunpack.c.l.b16 %v472
      %v477 = vunpack.c.h.b16 %v472
      %v478 = vunpack.c.l.b16 %v473
      %v479 = vunpack.c.h.b16 %v473
      %v480 = vpack.c.b16 %v476, %v476
      %v481 = vpack.c.b16 %v477, %v477
      %v482 = vpack.c.b16 %v478, %v478
      %v483 = vpack.c.b16 %v479, %v479
      %488 = vst [vmem:[%s207] sm:$0xf] %v480
      %489 = vst [vmem:[%s207 + $0x4] sm:$0xf] %v481
      %490 = vst [vmem:[%s207 + $0x8] sm:$0xf] %v482
      %491 = vst [vmem:[%s207 + $0xc] sm:$0xf] %v483
      %s492 = smul.u32 4, %s16
      %p493 = scmp.lt.s32.totalorder %s492, 7
      %s494 = scalar_select %p493, %s492, 7
      %s495 = smul.addr %s494, 4
      %s496 = scalar_lea.vmem %s3, %s495
      %s497 = smul.u32 4, %s16
      %p498 = scmp.lt.s32.totalorder %s497, 7
      %s499 = scalar_select %p498, %s497, 7
      %s500 = smul.addr %s499, 8
      %s501 = scalar_lea.vmem %s4, %s500
      // Predicated region
      $region33: #{gat_forward.4} parent=31 // pred_check
        %p502 = pneg %p102
      $region34: #{gat_forward.4} parent=31 // pred_check_branch
        %504 = sbr.rel (%p502) target = $region36
      $region35: #{gat_forward.4} parent=31 // pred_region
        %s505 = smul.u32 4, %s16
      $region36: #{gat_forward.4} parent=31 // pred_fallthru
        _
      // Predicated region
      $region37: #{gat_forward.4} parent=31 // pred_check
        %p506 = pneg %p128
      $region38: #{gat_forward.4} parent=31 // pred_check_branch
        %508 = sbr.rel (%p506) target = $region40
      $region39: #{gat_forward.4} parent=31 // pred_region
        %s509 = smul.u32 4, %s16
      $region40: #{gat_forward.4} parent=31 // pred_fallthru
        _
    $region32: #{gat_forward.4} parent=5 // pred_fallthru
      _
    %p510 = scmp.le.s32.totalorder 2, %s11
    // Predicated region
    $region41: #{gat_forward.4} parent=5 // pred_check
      %p511 = pneg %p510
    $region42: #{gat_forward.4} parent=5 // pred_check_branch
      %513 = sbr.rel (%p511) target = $region44
    $region43: #{gat_forward.4} parent=5 // pred_region
      %s514 = ssub.s32 %s11, 2
      // Predicated region
      $region45: #{gat_forward.4} parent=43 // pred_check
        %p515 = pneg %p108
      $region46: #{gat_forward.4} parent=43 // pred_check_branch
        %517 = sbr.rel (%p515) target = $region48
      $region47: #{gat_forward.4} parent=43 // pred_region
        %s518 = smul.u32 4, %s17
        %p519 = scmp.lt.s32.totalorder %s518, 7
        %s520 = scalar_select %p519, %s518, 7
        %s521 = smul.addr %s520, 4
        %s522 = scalar_lea.vmem %s3, %s521
      $region48: #{gat_forward.4} parent=43 // pred_fallthru
        _
      // Predicated region
      $region49: #{gat_forward.4} parent=43 // pred_check
        %p523 = pneg %p134
      $region50: #{gat_forward.4} parent=43 // pred_check_branch
        %525 = sbr.rel (%p523) target = $region52
      $region51: #{gat_forward.4} parent=43 // pred_region
        %s526 = smul.u32 4, %s17
        %p527 = scmp.lt.s32.totalorder %s526, 7
        %s528 = scalar_select %p527, %s526, 7
        %s529 = smul.addr %s528, 8
        %s530 = scalar_lea.vmem %s4, %s529
      $region52: #{gat_forward.4} parent=43 // pred_fallthru
        _
    $region44: #{gat_forward.4} parent=5 // pred_fallthru
      _
  $region6: #{gat_forward.4} parent=0 // loop_footer
    %s15 = sadd.s32 1, %s11
  $region7: #{gat_forward.4} parent=0 // loop_footer_branch
    %10 = sbr.rel target = $region3
  $region8: #{gat_forward.4} parent=0 // loop_exit
    _

// kernel: gat_forward.5
$region0: #{gat_forward.5}
  #allocation0 [shape = 'u32[]', space=smem, size = 0x4, offset = 0x4, fixed_abs, tag = 'smem constant byte address 0x4 - core index']
  #allocation1 [shape = 'u32[144,128]{1,0:T(1,128)}', space=vmem, size = 0x12000, scoped, tag = 'internal scratch']
  %s0 = inlined_call_operand.vmem [shape: f32[64,8], index: 0, kind: input, shape index: {}]
  %s1 = inlined_call_operand.vmem [shape: f32[8,64], index: 1, kind: input, shape index: {}]
  %s2 = inlined_call_operand.vmem [shape: bf16[64,128], index: 2, kind: input, shape index: {}]
  %s3 = inlined_call_operand.vmem [shape: s8[64,64], index: 3, kind: input, shape index: {}]
  %s4 = inlined_call_operand.vmem [shape: bf16[64,128], index: 4, kind: output, shape index: {}]
  %s5 = sld [smem:[#allocation0]]
  $region49: #{gat_forward.5} parent=0
    _
  %s7 = ssub.s32 1, %s5
  %s8 = scalar_select 0, %s7, %s5
  loop: start=0, step=1, limit=4
  $region2: #{gat_forward.5} parent=0 // loop_pre_header
    _
  $region3: #{gat_forward.5} parent=0 // loop_header
    %s10 = sphi 0, %s14
    %p11 = scmp.ge.s32.totalorder %s10, 4
    %s20 = sphi 0, %s22
    %s23 = sphi 0, %s20
    %s24 = sphi 0, %s23
    %s40 = sphi 0, %s24
    %s44 = sphi 0, %s44
    %s46 = sphi 0, %s44
    %s47 = sphi 0, %s46
    %s61 = sphi 0, %s47
    %s65 = sphi 0, %s65
    %s67 = sphi 0, %s65
    %s68 = sphi 0, %s67
    %s82 = sphi 0, %s68
    %s88 = sphi 0, %s90
    %s91 = sphi 0, %s88
    %s92 = sphi 0, %s91
    %s108 = sphi 0, %s92
    %s114 = sphi 0, %s116
    %s117 = sphi 0, %s114
    %s118 = sphi 0, %s117
    %s134 = sphi 0, %s118
  $region4: #{gat_forward.5} parent=0 // loop_header_branch
    %13 = sbr.rel (%p11) target = $region8
  $region5: #{gat_forward.5} parent=0 // loop_body
    %s15 = ssub.s32 %s10, 1
    %s16 = ssub.s32 %s10, 2
    %s17 = sadd.s32 %s10, 1
    %s18 = ssub.s32 %s10, %s17
    %p19 = scmp.eq.s32.totalorder %s18, 0
    %s21 = sadd.s32 %s20, 1
    %s22 = scalar_select %p19, %s20, %s21
    %p25 = pneg %p19
    %p26 = scmp.eq.s32.totalorder %s10, 1
    %p27 = por %p25, %p26
    %p28 = scmp.ne.s32.totalorder %s20, %s23
    %p29 = scmp.eq.s32.totalorder %s10, 0
    %p30 = por %p28, %p29
    %p31 = scmp.ne.s32.totalorder %s20, %s23
    %p32 = scmp.eq.s32.totalorder %s15, 1
    %p33 = por %p31, %p32
    %p34 = scmp.ne.s32.totalorder %s23, %s24
    %p35 = scmp.eq.s32.totalorder %s15, 0
    %p36 = por %p34, %p35
    %p37 = scmp.ne.s32.totalorder %s23, %s24
    %p38 = scmp.eq.s32.totalorder %s16, 1
    %p39 = por %p37, %p38
    %p41 = scmp.ne.s32.totalorder %s24, %s40
    %p42 = scmp.eq.s32.totalorder %s16, 0
    %p43 = por %p41, %p42
    %s45 = sadd.s32 %s44, 1
    %p48 = scmp.eq.s32.totalorder %s10, 1
    %p49 = scmp.ne.s32.totalorder %s44, %s46
    %p50 = scmp.eq.s32.totalorder %s10, 0
    %p51 = por %p49, %p50
    %p52 = scmp.ne.s32.totalorder %s44, %s46
    %p53 = scmp.eq.s32.totalorder %s15, 1
    %p54 = por %p52, %p53
    %p55 = scmp.ne.s32.totalorder %s46, %s47
    %p56 = scmp.eq.s32.totalorder %s15, 0
    %p57 = por %p55, %p56
    %p58 = scmp.ne.s32.totalorder %s46, %s47
    %p59 = scmp.eq.s32.totalorder %s16, 1
    %p60 = por %p58, %p59
    %p62 = scmp.ne.s32.totalorder %s47, %s61
    %p63 = scmp.eq.s32.totalorder %s16, 0
    %p64 = por %p62, %p63
    %s66 = sadd.s32 %s65, 1
    %p69 = scmp.eq.s32.totalorder %s10, 1
    %p70 = scmp.ne.s32.totalorder %s65, %s67
    %p71 = scmp.eq.s32.totalorder %s10, 0
    %p72 = por %p70, %p71
    %p73 = scmp.ne.s32.totalorder %s65, %s67
    %p74 = scmp.eq.s32.totalorder %s15, 1
    %p75 = por %p73, %p74
    %p76 = scmp.ne.s32.totalorder %s67, %s68
    %p77 = scmp.eq.s32.totalorder %s15, 0
    %p78 = por %p76, %p77
    %p79 = scmp.ne.s32.totalorder %s67, %s68
    %p80 = scmp.eq.s32.totalorder %s16, 1
    %p81 = por %p79, %p80
    %p83 = scmp.ne.s32.totalorder %s68, %s82
    %p84 = scmp.eq.s32.totalorder %s16, 0
    %p85 = por %p83, %p84
    %s86 = ssub.s32 %s10, %s17
    %p87 = scmp.eq.s32.totalorder %s86, 0
    %s89 = sadd.s32 %s88, 1
    %s90 = scalar_select %p87, %s88, %s89
    %p93 = pneg %p87
    %p94 = scmp.eq.s32.totalorder %s10, 1
    %p95 = por %p93, %p94
    %p96 = scmp.ne.s32.totalorder %s88, %s91
    %p97 = scmp.eq.s32.totalorder %s10, 0
    %p98 = por %p96, %p97
    %p99 = scmp.ne.s32.totalorder %s88, %s91
    %p100 = scmp.eq.s32.totalorder %s15, 1
    %p101 = por %p99, %p100
    %p102 = scmp.ne.s32.totalorder %s91, %s92
    %p103 = scmp.eq.s32.totalorder %s15, 0
    %p104 = por %p102, %p103
    %p105 = scmp.ne.s32.totalorder %s91, %s92
    %p106 = scmp.eq.s32.totalorder %s16, 1
    %p107 = por %p105, %p106
    %p109 = scmp.ne.s32.totalorder %s92, %s108
    %p110 = scmp.eq.s32.totalorder %s16, 0
    %p111 = por %p109, %p110
    %s112 = ssub.s32 %s10, %s17
    %p113 = scmp.eq.s32.totalorder %s112, 0
    %s115 = sadd.s32 %s114, 1
    %s116 = scalar_select %p113, %s114, %s115
    %p119 = pneg %p113
    %p120 = scmp.eq.s32.totalorder %s10, 1
    %p121 = por %p119, %p120
    %p122 = scmp.ne.s32.totalorder %s114, %s117
    %p123 = scmp.eq.s32.totalorder %s10, 0
    %p124 = por %p122, %p123
    %p125 = scmp.ne.s32.totalorder %s114, %s117
    %p126 = scmp.eq.s32.totalorder %s15, 1
    %p127 = por %p125, %p126
    %p128 = scmp.ne.s32.totalorder %s117, %s118
    %p129 = scmp.eq.s32.totalorder %s15, 0
    %p130 = por %p128, %p129
    %p131 = scmp.ne.s32.totalorder %s117, %s118
    %p132 = scmp.eq.s32.totalorder %s16, 1
    %p133 = por %p131, %p132
    %p135 = scmp.ne.s32.totalorder %s118, %s134
    %p136 = scmp.eq.s32.totalorder %s16, 0
    %p137 = por %p135, %p136
    %p138 = scmp.le.s32.totalorder 1, %s10
    %p139 = scmp.lt.s32.totalorder %s10, 3
    %p140 = pnand %p138, %p139
    %p141 = pneg %p140
    // Predicated region
    $region9: #{gat_forward.5} parent=5 // pred_check
      _
    $region10: #{gat_forward.5} parent=5 // pred_check_branch
      %143 = sbr.rel (%p140) target = $region12
    $region11: #{gat_forward.5} parent=5 // pred_region
      %s144 = ssub.s32 %s10, 1
      // Predicated region
      $region13: #{gat_forward.5} parent=11 // pred_check
        %p145 = pneg %p57
      $region14: #{gat_forward.5} parent=11 // pred_check_branch
        %147 = sbr.rel (%p145) target = $region16
      $region15: #{gat_forward.5} parent=11 // pred_region
        _
      $region16: #{gat_forward.5} parent=11 // pred_fallthru
        _
      // Predicated region
      $region17: #{gat_forward.5} parent=11 // pred_check
        %p148 = pneg %p78
      $region18: #{gat_forward.5} parent=11 // pred_check_branch
        %150 = sbr.rel (%p148) target = $region20
      $region19: #{gat_forward.5} parent=11 // pred_region
        _
      $region20: #{gat_forward.5} parent=11 // pred_fallthru
        _
    $region12: #{gat_forward.5} parent=5 // pred_fallthru
      _
    %p151 = scmp.lt.s32.totalorder %s10, 2
    // Predicated region
    $region21: #{gat_forward.5} parent=5 // pred_check
      %p152 = pneg %p151
    $region22: #{gat_forward.5} parent=5 // pred_check_branch
      %154 = sbr.rel (%p152) target = $region24
    $region23: #{gat_forward.5} parent=5 // pred_region
      // Predicated region
      $region25: #{gat_forward.5} parent=23 // pred_check
        %p155 = pneg %p30
      $region26: #{gat_forward.5} parent=23 // pred_check_branch
        %157 = sbr.rel (%p155) target = $region28
      $region27: #{gat_forward.5} parent=23 // pred_region
        %s158 = smul.u32 4, %s10
        %p159 = scmp.lt.s32.totalorder %s158, 7
        %s160 = scalar_select %p159, %s158, 7
        %s161 = smul.addr %s160, 8
        %s162 = scalar_lea.vmem %s0, %s161
        %s163 = smul.u32 4, %s10
      $region28: #{gat_forward.5} parent=23 // pred_fallthru
        _
      // Predicated region
      $region29: #{gat_forward.5} parent=23 // pred_check
        %p164 = pneg %p98
      $region30: #{gat_forward.5} parent=23 // pred_check_branch
        %166 = sbr.rel (%p164) target = $region32
      $region31: #{gat_forward.5} parent=23 // pred_region
        %p167 = scmp.lt.s32.totalorder %s10, 1
        %s168 = scalar_select %p167, %s10, 1
        %s169 = smul.addr %s168, 8
        %s170 = scalar_lea.vmem %s3, %s169
      $region32: #{gat_forward.5} parent=23 // pred_fallthru
        _
    $region24: #{gat_forward.5} parent=5 // pred_fallthru
      _
    %p171 = scmp.le.s32.totalorder 1, %s10
    %p172 = scmp.lt.s32.totalorder %s10, 3
    %p173 = pnand %p171, %p172
    %p174 = pneg %p173
    // Predicated region
    $region33: #{gat_forward.5} parent=5 // pred_check
      _
    $region34: #{gat_forward.5} parent=5 // pred_check_branch
      %176 = sbr.rel (%p173) target = $region36
    $region35: #{gat_forward.5} parent=5 // pred_region
      %s177 = ssub.s32 %s10, 1
      %s178 = smul.u32 4, %s15
      %p179 = scmp.lt.s32.totalorder %s178, 7
      %s180 = scalar_select %p179, %s178, 7
      %s181 = smul.addr %s180, 8
      %s182 = scalar_lea.vmem %s0, %s181
      %p183 = pneg %p36
      %p184 = pneg %p33
      %p185 = pneg %p57
      %p186 = pneg %p54
      %p187 = pneg %p78
      %p188 = pneg %p75
      %p189 = scmp.lt.s32.totalorder %s15, 1
      %s190 = scalar_select %p189, %s15, 1
      %s191 = smul.addr %s190, 8
      %s192 = scalar_lea.vmem %s3, %s191
      %p193 = pneg %p104
      %p194 = pneg %p101
      %p195 = pneg %p130
      %p196 = pneg %p127
      %s197 = smul.u32 4, %s15
      %p198 = scmp.lt.s32.totalorder %s197, 7
      %s199 = scalar_select %p198, %s197, 7
      %s200 = smul.addr %s199, 4
      %s201 = scalar_lea.vmem %s4, %s200
      %s202 = smul.u32 4, %s15
      %p203 = scmp.lt.s32.totalorder %s202, 7
      %s204 = scalar_select %p203, %s202, 7
      %s205 = smul.addr %s204, 8
      %s206 = scalar_lea.vmem %s0, %s205
      %s207 = smul.u32 4, %s15
      %p208 = scmp.lt.s32.totalorder %s15, 1
      %s209 = scalar_select %p208, %s15, 1
      %s210 = smul.addr %s209, 8
      %s211 = scalar_lea.vmem %s3, %s210
      %s212 = smul.u32 4, %s15
      %p213 = scmp.lt.s32.totalorder %s212, 7
      %s214 = scalar_select %p213, %s212, 7
      %s215 = smul.addr %s214, 4
      %s216 = scalar_lea.vmem %s4, %s215
      %s217 = smul.u32 4, %s15
      %v219 = vld [vmem:[%s206] sm:$0xff]
      %v220 = vld [vmem:[%s206 + $0x8] sm:$0xff]
      %v221 = vld [vmem:[%s206 + $0x10] sm:$0xff]
      %v222 = vld [vmem:[%s206 + $0x18] sm:$0xff]
      %v223 = vld [vmem:[%s1] sm:$0xff]
      %v224 = vld [vmem:[%s2] sm:$0xf]
      %v225 = vld [vmem:[%s2 + $0x4] sm:$0xf]
      %v226 = vld [vmem:[%s2 + $0x8] sm:$0xf]
      %v227 = vld [vmem:[%s2 + $0xc] sm:$0xf]
      %v228 = vld [vmem:[%s2 + $0x10] sm:$0xf]
      %v229 = vld [vmem:[%s2 + $0x14] sm:$0xf]
      %v230 = vld [vmem:[%s2 + $0x18] sm:$0xf]
      %v231 = vld [vmem:[%s2 + $0x1c] sm:$0xf]
      %v232 = vld [vmem:[%s211] sm:$0xff]
      %v233 = vunpack.c.0.s8 %v232
      %v234 = vunpack.c.1.s8 %v232
      %v235 = vunpack.c.2.s8 %v232
      %v236 = vunpack.c.3.s8 %v232
      %v237 = vcvt.s32.f32 %v233
      %v238 = vcvt.s32.f32 %v234
      %v239 = vcvt.s32.f32 %v235
      %v240 = vcvt.s32.f32 %v236
      %v241 = vsub.f32 %v237, 1.0
      %v242 = vsub.f32 %v238, 1.0
      %v243 = vsub.f32 %v239, 1.0
      %v244 = vsub.f32 %v240, 1.0
      %v245 = vmul.f32 %v241, 1e+30
      %v246 = vmul.f32 %v242, 1e+30
      %v247 = vmul.f32 %v243, 1e+30
      %v248 = vmul.f32 %v244, 1e+30
      %v249 = vlaneseq
      %v250 = vand.u32 %v249, 127
      %252 = vset.pattern.permute.xlu0 0
      %253 = vperm.xlu0 %252, %v219
      %v254 = vpop.permute.xlu0 %253
      %257 = vset.pattern.permute.xlu0 0
      %258 = vperm.xlu0 %257, %v220
      %v259 = vpop.permute.xlu0 %258
      %262 = vset.pattern.permute.xlu0 0
      %263 = vperm.xlu0 %262, %v221
      %v264 = vpop.permute.xlu0 %263
      %267 = vset.pattern.permute.xlu0 0
      %268 = vperm.xlu0 %267, %v222
      %v269 = vpop.permute.xlu0 %268
      %v271 = vlaneseq
      %v272 = vshrl.u32 %v271, 7
      %v273 = vsub.s32 4, %v272
      %v274 = vrot.slane %v223, %v273
      %v275 = vadd.f32 %v254, %v274
      %v276 = vadd.f32 %v259, %v274
      %v277 = vadd.f32 %v264, %v274
      %v278 = vadd.f32 %v269, %v274
      %v279 = vmul.f32 %v275, 0.2
      %v280 = vmul.f32 %v276, 0.2
      %v281 = vmul.f32 %v277, 0.2
      %v282 = vmul.f32 %v278, 0.2
      %v283 = vmax.f32 %v275, %v279
      %v284 = vmax.f32 %v276, %v280
      %v285 = vmax.f32 %v277, %v281
      %v286 = vmax.f32 %v278, %v282
      %v287 = vadd.f32 %v283, %v245
      %v288 = vadd.f32 %v284, %v246
      %v289 = vadd.f32 %v285, %v247
      %v290 = vadd.f32 %v286, %v248
      %vm291 = vcmask 523264
      %v292 = vsel %vm291, %v287, -inf
      %293 = vmax.xlane.f32.xlu0 %v292
      %v294 = vpop.xlane.xlu0 %293
      %v295 = vsel %vm291, %v288, -inf
      %296 = vmax.xlane.f32.xlu0 %v295
      %v297 = vpop.xlane.xlu0 %296
      %v298 = vsel %vm291, %v289, -inf
      %299 = vmax.xlane.f32.xlu0 %v298
      %v300 = vpop.xlane.xlu0 %299
      %v301 = vsel %vm291, %v290, -inf
      %302 = vmax.xlane.f32.xlu0 %v301
      %v303 = vpop.xlane.xlu0 %302
      %v304 = vsub.f32 %v287, %v294
      %v305 = vsub.f32 %v288, %v297
      %v306 = vsub.f32 %v289, %v300
      %v307 = vsub.f32 %v290, %v303
      %v308 = vpack.c.bf16 %v305, %v304
      %v309 = vpack.c.bf16 %v307, %v306
      %v311 = vmul.bf16 %v308, 1069105081
      %v312 = vpow.bf16.pop %v311
      %v314 = vmul.bf16 %v309, 1069105081
      %v315 = vpow.bf16.pop %v314
      %v324 = vunpack.c.l.b16 %v224
      %v325 = vunpack.c.l.b16 %v225
      %v326 = vunpack.c.l.b16 %v226
      %v327 = vunpack.c.l.b16 %v227
      %v328 = vunpack.c.l.b16 %v228
      %v329 = vunpack.c.l.b16 %v229
      %v330 = vunpack.c.l.b16 %v230
      %v331 = vunpack.c.l.b16 %v231
      %v332 = vpack.c.b16 %v325, %v324
      %v333 = vpack.c.b16 %v327, %v326
      %v334 = vpack.c.b16 %v329, %v328
      %v335 = vpack.c.b16 %v331, %v330
      %v341 = vsel %vm291, %v312, 0
      %v344 = vsel %vm291, %v315, 0
      %346 = vmatprep.subr.bf16.mxu0 0
      %347 = vmatpush1.bf16.msra.mxu0 %v332
      %348 = vmatprep.subr.bf16.mxu0 0
      %349 = vmatpush1.bf16.msra.mxu0 %v333
      %350 = vmatprep.subr.bf16.mxu0 0
      %351 = vmatpush1.bf16.msra.mxu0 %v334
      %352 = vmatprep.subr.bf16.mxu0 0
      %353 = vmatpush1.bf16.msra.mxu0 %v335
      %354 = vmatprep.subr.bf16.mxu0 0
      %355 = vmatpush1.bf16.msra.mxu0 0
      %356 = vmatprep.subr.bf16.mxu0 0
      %357 = vmatpush1.bf16.msra.mxu0 0
      %358 = vmatprep.subr.bf16.mxu0 0
      %359 = vmatpush1.bf16.msra.mxu0 0
      %360 = vmatprep.subr.bf16.mxu0 0
      %361 = vmatpush1.bf16.msra.mxu0 0
      %362 = vmatprep.subr.bf16.mxu0 0
      %363 = vmatpush1.bf16.msra.mxu0 0
      %364 = vmatprep.subr.bf16.mxu0 0
      %365 = vmatpush1.bf16.msra.mxu0 0
      %366 = vmatprep.subr.bf16.mxu0 0
      %367 = vmatpush1.bf16.msra.mxu0 0
      %368 = vmatprep.subr.bf16.mxu0 0
      %369 = vmatpush1.bf16.msra.mxu0 0
      %370 = vmatprep.subr.bf16.mxu0 0
      %371 = vmatpush1.bf16.msra.mxu0 0
      %372 = vmatprep.subr.bf16.mxu0 0
      %373 = vmatpush1.bf16.msra.mxu0 0
      %374 = vmatprep.subr.bf16.mxu0 0
      %375 = vmatpush1.bf16.msra.mxu0 0
      %376 = vmatprep.subr.bf16.mxu0 0
      %377 = vmatpush1.bf16.msra.mxu0 0
      %378 = vmatprep.mubr.bf16.mxu0 0
      %379 = vmatmul.mubr.bf16.gmra.mrb[0].mxu0 %v341
      %v380 = vpop.f32.mrb[0].mxu0
      %v381 = vadd.f32 0.0, %v380
      %v382 = vpop.f32.mrb[0].mxu0
      %v383 = vpop.f32.mrb[0].mxu0
      %v384 = vadd.f32 0.0, %v383
      %v385 = vpop.f32.mrb[0].mxu0
      %386 = vmatprep.mubr.bf16.mxu0 0
      %387 = vmatmul.mubr.bf16.gmra.mrb[0].mxu0 %v344
      %v388 = vpop.f32.mrb[0].mxu0
      %v389 = vadd.f32 0.0, %v388
      %v390 = vpop.f32.mrb[0].mxu0
      %v391 = vpop.f32.mrb[0].mxu0
      %v392 = vadd.f32 0.0, %v391
      %v393 = vpop.f32.mrb[0].mxu0
      %394 = vdwg.mxu0
      %v395 = vrcp.pop %v381
      %v396 = vrcp.pop %v384
      %v397 = vrcp.pop %v389
      %v398 = vrcp.pop %v392
      %400 = vset.pattern.permute.xlu0 32
      %401 = vperm.xlu0 %400, %v395
      %v402 = vpop.permute.xlu0 %401
      %405 = vset.pattern.permute.xlu0 32
      %406 = vperm.xlu0 %405, %v396
      %v407 = vpop.permute.xlu0 %406
      %410 = vset.pattern.permute.xlu0 32
      %411 = vperm.xlu0 %410, %v397
      %v412 = vpop.permute.xlu0 %411
      %415 = vset.pattern.permute.xlu0 32
      %416 = vperm.xlu0 %415, %v398
      %v417 = vpop.permute.xlu0 %416
      %v419 = vmul.f32 %v381, %v402
      %v420 = vmul.f32 %v384, %v407
      %v421 = vmul.f32 %v389, %v412
      %v422 = vmul.f32 %v392, %v417
      %vm423 = vcmp.ge.s32.totalorder %v250, 0
      %vm424 = vcmp.lt.s32.totalorder %v250, 8
      %vm425 = vmand %vm423, %vm424
      %v426 = vsel %vm425, %v419, 0.0
      %v427 = vsel %vm425, %v420, 0.0
      %v428 = vsel %vm425, %v421, 0.0
      %v429 = vsel %vm425, %v422, 0.0
      %430 = vset.pattern.permute.xlu0 1
      %431 = vperm.xlu0 %430, %v219
      %v432 = vpop.permute.xlu0 %431
      %434 = vset.pattern.permute.xlu0 1
      %435 = vperm.xlu0 %434, %v220
      %v436 = vpop.permute.xlu0 %435
      %438 = vset.pattern.permute.xlu0 1
      %439 = vperm.xlu0 %438, %v221
      %v440 = vpop.permute.xlu0 %439
      %442 = vset.pattern.permute.xlu0 1
      %443 = vperm.xlu0 %442, %v222
      %v444 = vpop.permute.xlu0 %443
      %v446 = vlaneseq
      %v447 = vshrl.u32 %v446, 7
      %v448 = vsub.s32 5, %v447
      %v449 = vrot.slane %v223, %v448
      %v450 = vadd.f32 %v432, %v449
      %v451 = vadd.f32 %v436, %v449
      %v452 = vadd.f32 %v440, %v449
      %v453 = vadd.f32 %v444, %v449
      %v454 = vmul.f32 %v450, 0.2
      %v455 = vmul.f32 %v451, 0.2
      %v456 = vmul.f32 %v452, 0.2
      %v457 = vmul.f32 %v453, 0.2
      %v458 = vmax.f32 %v450, %v454
      %v459 = vmax.f32 %v451, %v455
      %v460 = vmax.f32 %v452, %v456
      %v461 = vmax.f32 %v453, %v457
      %v462 = vadd.f32 %v458, %v245
      %v463 = vadd.f32 %v459, %v246
      %v464 = vadd.f32 %v460, %v247
      %v465 = vadd.f32 %v461, %v248
      %v466 = vsel %vm291, %v462, -inf
      %467 = vmax.xlane.f32.xlu0 %v466
      %v468 = vpop.xlane.xlu0 %467
      %v469 = vsel %vm291, %v463, -inf
      %470 = vmax.xlane.f32.xlu0 %v469
      %v471 = vpop.xlane.xlu0 %470
      %v472 = vsel %vm291, %v464, -inf
      %473 = vmax.xlane.f32.xlu0 %v472
      %v474 = vpop.xlane.xlu0 %473
      %v475 = vsel %vm291, %v465, -inf
      %476 = vmax.xlane.f32.xlu0 %v475
      %v477 = vpop.xlane.xlu0 %476
      %v478 = vsub.f32 %v462, %v468
      %v479 = vsub.f32 %v463, %v471
      %v480 = vsub.f32 %v464, %v474
      %v481 = vsub.f32 %v465, %v477
      %v482 = vpack.c.bf16 %v479, %v478
      %v483 = vpack.c.bf16 %v481, %v480
      %v485 = vmul.bf16 %v482, 1069105081
      %v486 = vpow.bf16.pop %v485
      %v488 = vmul.bf16 %v483, 1069105081
      %v489 = vpow.bf16.pop %v488
      %v491 = vsel %vm291, %v486, 0
      %v494 = vsel %vm291, %v489, 0
      %496 = vmatprep.subr.bf16.mxu0 0
      %497 = vmatpush1.bf16.msra.mxu0 %v332
      %498 = vmatprep.subr.bf16.mxu0 0
      %499 = vmatpush1.bf16.msra.mxu0 %v333
      %500 = vmatprep.subr.bf16.mxu0 0
      %501 = vmatpush1.bf16.msra.mxu0 %v334
      %502 = vmatprep.subr.bf16.mxu0 0
      %503 = vmatpush1.bf16.msra.mxu0 %v335
      %504 = vmatprep.subr.bf16.mxu0 0
      %505 = vmatpush1.bf16.msra.mxu0 0
      %506 = vmatprep.subr.bf16.mxu0 0
      %507 = vmatpush1.bf16.msra.mxu0 0
      %508 = vmatprep.subr.bf16.mxu0 0
      %509 = vmatpush1.bf16.msra.mxu0 0
      %510 = vmatprep.subr.bf16.mxu0 0
      %511 = vmatpush1.bf16.msra.mxu0 0
      %512 = vmatprep.subr.bf16.mxu0 0
      %513 = vmatpush1.bf16.msra.mxu0 0
      %514 = vmatprep.subr.bf16.mxu0 0
      %515 = vmatpush1.bf16.msra.mxu0 0
      %516 = vmatprep.subr.bf16.mxu0 0
      %517 = vmatpush1.bf16.msra.mxu0 0
      %518 = vmatprep.subr.bf16.mxu0 0
      %519 = vmatpush1.bf16.msra.mxu0 0
      %520 = vmatprep.subr.bf16.mxu0 0
      %521 = vmatpush1.bf16.msra.mxu0 0
      %522 = vmatprep.subr.bf16.mxu0 0
      %523 = vmatpush1.bf16.msra.mxu0 0
      %524 = vmatprep.subr.bf16.mxu0 0
      %525 = vmatpush1.bf16.msra.mxu0 0
      %526 = vmatprep.subr.bf16.mxu0 0
      %527 = vmatpush1.bf16.msra.mxu0 0
      %528 = vmatprep.mubr.bf16.mxu0 0
      %529 = vmatmul.mubr.bf16.gmra.mrb[0].mxu0 %v491
      %v530 = vpop.f32.mrb[0].mxu0
      %v531 = vadd.f32 0.0, %v530
      %v532 = vpop.f32.mrb[0].mxu0
      %v533 = vpop.f32.mrb[0].mxu0
      %v534 = vadd.f32 0.0, %v533
      %v535 = vpop.f32.mrb[0].mxu0
      %536 = vmatprep.mubr.bf16.mxu0 0
      %537 = vmatmul.mubr.bf16.gmra.mrb[0].mxu0 %v494
      %v538 = vpop.f32.mrb[0].mxu0
      %v539 = vadd.f32 0.0, %v538
      %v540 = vpop.f32.mrb[0].mxu0
      %v541 = vpop.f32.mrb[0].mxu0
      %v542 = vadd.f32 0.0, %v541
      %v543 = vpop.f32.mrb[0].mxu0
      %544 = vdwg.mxu0
      %v545 = vrcp.pop %v531
      %v546 = vrcp.pop %v534
      %v547 = vrcp.pop %v539
      %v548 = vrcp.pop %v542
      %550 = vset.pattern.permute.xlu0 32
      %551 = vperm.xlu0 %550, %v545
      %v552 = vpop.permute.xlu0 %551
      %555 = vset.pattern.permute.xlu0 32
      %556 = vperm.xlu0 %555, %v546
      %v557 = vpop.permute.xlu0 %556
      %560 = vset.pattern.permute.xlu0 32
      %561 = vperm.xlu0 %560, %v547
      %v562 = vpop.permute.xlu0 %561
      %565 = vset.pattern.permute.xlu0 32
      %566 = vperm.xlu0 %565, %v548
      %v567 = vpop.permute.xlu0 %566
      %v569 = vmul.f32 %v531, %v552
      %v570 = vmul.f32 %v534, %v557
      %v571 = vmul.f32 %v539, %v562
      %v572 = vmul.f32 %v542, %v567
      %vm573 = vcmp.ge.s32.totalorder %v250, 8
      %vm574 = vcmp.lt.s32.totalorder %v250, 16
      %vm575 = vmand %vm573, %vm574
      %v576 = vsel %vm575, %v569, %v426
      %v577 = vsel %vm575, %v570, %v427
      %v578 = vsel %vm575, %v571, %v428
      %v579 = vsel %vm575, %v572, %v429
      %580 = vset.pattern.permute.xlu0 2
      %581 = vperm.xlu0 %580, %v219
      %v582 = vpop.permute.xlu0 %581
      %584 = vset.pattern.permute.xlu0 2
      %585 = vperm.xlu0 %584, %v220
      %v586 = vpop.permute.xlu0 %585
      %588 = vset.pattern.permute.xlu0 2
      %589 = vperm.xlu0 %588, %v221
      %v590 = vpop.permute.xlu0 %589
      %592 = vset.pattern.permute.xlu0 2
      %593 = vperm.xlu0 %592, %v222
      %v594 = vpop.permute.xlu0 %593
      %v596 = vlaneseq
      %v597 = vshrl.u32 %v596, 7
      %v598 = vsub.s32 6, %v597
      %v599 = vrot.slane %v223, %v598
      %v600 = vadd.f32 %v582, %v599
      %v601 = vadd.f32 %v586, %v599
      %v602 = vadd.f32 %v590, %v599
      %v603 = vadd.f32 %v594, %v599
      %v604 = vmul.f32 %v600, 0.2
      %v605 = vmul.f32 %v601, 0.2
      %v606 = vmul.f32 %v602, 0.2
      %v607 = vmul.f32 %v603, 0.2
      %v608 = vmax.f32 %v600, %v604
      %v609 = vmax.f32 %v601, %v605
      %v610 = vmax.f32 %v602, %v606
      %v611 = vmax.f32 %v603, %v607
      %v612 = vadd.f32 %v608, %v245
      %v613 = vadd.f32 %v609, %v246
      %v614 = vadd.f32 %v610, %v247
      %v615 = vadd.f32 %v611, %v248
      %v616 = vsel %vm291, %v612, -inf
      %617 = vmax.xlane.f32.xlu0 %v616
      %v618 = vpop.xlane.xlu0 %617
      %v619 = vsel %vm291, %v613, -inf
      %620 = vmax.xlane.f32.xlu0 %v619
      %v621 = vpop.xlane.xlu0 %620
      %v622 = vsel %vm291, %v614, -inf
      %623 = vmax.xlane.f32.xlu0 %v622
      %v624 = vpop.xlane.xlu0 %623
      %v625 = vsel %vm291, %v615, -inf
      %626 = vmax.xlane.f32.xlu0 %v625
      %v627 = vpop.xlane.xlu0 %626
      %v628 = vsub.f32 %v612, %v618
      %v629 = vsub.f32 %v613, %v621
      %v630 = vsub.f32 %v614, %v624
      %v631 = vsub.f32 %v615, %v627
      %v632 = vpack.c.bf16 %v629, %v628
      %v633 = vpack.c.bf16 %v631, %v630
      %v635 = vmul.bf16 %v632, 1069105081
      %v636 = vpow.bf16.pop %v635
      %v638 = vmul.bf16 %v633, 1069105081
      %v639 = vpow.bf16.pop %v638
      %v641 = vsel %vm291, %v636, 0
      %v644 = vsel %vm291, %v639, 0
      %646 = vmatprep.subr.bf16.mxu0 0
      %647 = vmatpush1.bf16.msra.mxu0 %v332
      %648 = vmatprep.subr.bf16.mxu0 0
      %649 = vmatpush1.bf16.msra.mxu0 %v333
      %650 = vmatprep.subr.bf16.mxu0 0
      %651 = vmatpush1.bf16.msra.mxu0 %v334
      %652 = vmatprep.subr.bf16.mxu0 0
      %653 = vmatpush1.bf16.msra.mxu0 %v335
      %654 = vmatprep.subr.bf16.mxu0 0
      %655 = vmatpush1.bf16.msra.mxu0 0
      %656 = vmatprep.subr.bf16.mxu0 0
      %657 = vmatpush1.bf16.msra.mxu0 0
      %658 = vmatprep.subr.bf16.mxu0 0
      %659 = vmatpush1.bf16.msra.mxu0 0
      %660 = vmatprep.subr.bf16.mxu0 0
      %661 = vmatpush1.bf16.msra.mxu0 0
      %662 = vmatprep.subr.bf16.mxu0 0
      %663 = vmatpush1.bf16.msra.mxu0 0
      %664 = vmatprep.subr.bf16.mxu0 0
      %665 = vmatpush1.bf16.msra.mxu0 0
      %666 = vmatprep.subr.bf16.mxu0 0
      %667 = vmatpush1.bf16.msra.mxu0 0
      %668 = vmatprep.subr.bf16.mxu0 0
      %669 = vmatpush1.bf16.msra.mxu0 0
      %670 = vmatprep.subr.bf16.mxu0 0
      %671 = vmatpush1.bf16.msra.mxu0 0
      %672 = vmatprep.subr.bf16.mxu0 0
      %673 = vmatpush1.bf16.msra.mxu0 0
      %674 = vmatprep.subr.bf16.mxu0 0
      %675 = vmatpush1.bf16.msra.mxu0 0
      %676 = vmatprep.subr.bf16.mxu0 0
      %677 = vmatpush1.bf16.msra.mxu0 0
      %678 = vmatprep.mubr.bf16.mxu0 0
      %679 = vmatmul.mubr.bf16.gmra.mrb[0].mxu0 %v641
      %v680 = vpop.f32.mrb[0].mxu0
      %v681 = vadd.f32 0.0, %v680
      %v682 = vpop.f32.mrb[0].mxu0
      %v683 = vpop.f32.mrb[0].mxu0
      %v684 = vadd.f32 0.0, %v683
      %v685 = vpop.f32.mrb[0].mxu0
      %686 = vmatprep.mubr.bf16.mxu0 0
      %687 = vmatmul.mubr.bf16.gmra.mrb[0].mxu0 %v644
      %v688 = vpop.f32.mrb[0].mxu0
      %v689 = vadd.f32 0.0, %v688
      %v690 = vpop.f32.mrb[0].mxu0
      %v691 = vpop.f32.mrb[0].mxu0
      %v692 = vadd.f32 0.0, %v691
      %v693 = vpop.f32.mrb[0].mxu0
      %694 = vdwg.mxu0
      %v695 = vrcp.pop %v681
      %v696 = vrcp.pop %v684
      %v697 = vrcp.pop %v689
      %v698 = vrcp.pop %v692
      %700 = vset.pattern.permute.xlu0 32
      %701 = vperm.xlu0 %700, %v695
      %v702 = vpop.permute.xlu0 %701
      %705 = vset.pattern.permute.xlu0 32
      %706 = vperm.xlu0 %705, %v696
      %v707 = vpop.permute.xlu0 %706
      %710 = vset.pattern.permute.xlu0 32
      %711 = vperm.xlu0 %710, %v697
      %v712 = vpop.permute.xlu0 %711
      %715 = vset.pattern.permute.xlu0 32
      %716 = vperm.xlu0 %715, %v698
      %v717 = vpop.permute.xlu0 %716
      %v719 = vmul.f32 %v681, %v702
      %v720 = vmul.f32 %v684, %v707
      %v721 = vmul.f32 %v689, %v712
      %v722 = vmul.f32 %v692, %v717
      %vm723 = vcmp.ge.s32.totalorder %v250, 16
      %vm724 = vcmp.lt.s32.totalorder %v250, 24
      %vm725 = vmand %vm723, %vm724
      %v726 = vsel %vm725, %v719, %v576
      %v727 = vsel %vm725, %v720, %v577
      %v728 = vsel %vm725, %v721, %v578
      %v729 = vsel %vm725, %v722, %v579
      %730 = vset.pattern.permute.xlu0 3
      %731 = vperm.xlu0 %730, %v219
      %v732 = vpop.permute.xlu0 %731
      %734 = vset.pattern.permute.xlu0 3
      %735 = vperm.xlu0 %734, %v220
      %v736 = vpop.permute.xlu0 %735
      %738 = vset.pattern.permute.xlu0 3
      %739 = vperm.xlu0 %738, %v221
      %v740 = vpop.permute.xlu0 %739
      %742 = vset.pattern.permute.xlu0 3
      %743 = vperm.xlu0 %742, %v222
      %v744 = vpop.permute.xlu0 %743
      %v746 = vlaneseq
      %v747 = vshrl.u32 %v746, 7
      %v748 = vsub.s32 7, %v747
      %v749 = vrot.slane %v223, %v748
      %v750 = vadd.f32 %v732, %v749
      %v751 = vadd.f32 %v736, %v749
      %v752 = vadd.f32 %v740, %v749
      %v753 = vadd.f32 %v744, %v749
      %v754 = vmul.f32 %v750, 0.2
      %v755 = vmul.f32 %v751, 0.2
      %v756 = vmul.f32 %v752, 0.2
      %v757 = vmul.f32 %v753, 0.2
      %v758 = vmax.f32 %v750, %v754
      %v759 = vmax.f32 %v751, %v755
      %v760 = vmax.f32 %v752, %v756
      %v761 = vmax.f32 %v753, %v757
      %v762 = vadd.f32 %v758, %v245
      %v763 = vadd.f32 %v759, %v246
      %v764 = vadd.f32 %v760, %v247
      %v765 = vadd.f32 %v761, %v248
      %v766 = vsel %vm291, %v762, -inf
      %767 = vmax.xlane.f32.xlu0 %v766
      %v768 = vpop.xlane.xlu0 %767
      %v769 = vsel %vm291, %v763, -inf
      %770 = vmax.xlane.f32.xlu0 %v769
      %v771 = vpop.xlane.xlu0 %770
      %v772 = vsel %vm291, %v764, -inf
      %773 = vmax.xlane.f32.xlu0 %v772
      %v774 = vpop.xlane.xlu0 %773
      %v775 = vsel %vm291, %v765, -inf
      %776 = vmax.xlane.f32.xlu0 %v775
      %v777 = vpop.xlane.xlu0 %776
      %v778 = vsub.f32 %v762, %v768
      %v779 = vsub.f32 %v763, %v771
      %v780 = vsub.f32 %v764, %v774
      %v781 = vsub.f32 %v765, %v777
      %v782 = vpack.c.bf16 %v779, %v778
      %v783 = vpack.c.bf16 %v781, %v780
      %v785 = vmul.bf16 %v782, 1069105081
      %v786 = vpow.bf16.pop %v785
      %v788 = vmul.bf16 %v783, 1069105081
      %v789 = vpow.bf16.pop %v788
      %v791 = vsel %vm291, %v786, 0
      %v794 = vsel %vm291, %v789, 0
      %796 = vmatprep.subr.bf16.mxu0 0
      %797 = vmatpush1.bf16.msra.mxu0 %v332
      %798 = vmatprep.subr.bf16.mxu0 0
      %799 = vmatpush1.bf16.msra.mxu0 %v333
      %800 = vmatprep.subr.bf16.mxu0 0
      %801 = vmatpush1.bf16.msra.mxu0 %v334
      %802 = vmatprep.subr.bf16.mxu0 0
      %803 = vmatpush1.bf16.msra.mxu0 %v335
      %804 = vmatprep.subr.bf16.mxu0 0
      %805 = vmatpush1.bf16.msra.mxu0 0
      %806 = vmatprep.subr.bf16.mxu0 0
      %807 = vmatpush1.bf16.msra.mxu0 0
      %808 = vmatprep.subr.bf16.mxu0 0
      %809 = vmatpush1.bf16.msra.mxu0 0
      %810 = vmatprep.subr.bf16.mxu0 0
      %811 = vmatpush1.bf16.msra.mxu0 0
      %812 = vmatprep.subr.bf16.mxu0 0
      %813 = vmatpush1.bf16.msra.mxu0 0
      %814 = vmatprep.subr.bf16.mxu0 0
      %815 = vmatpush1.bf16.msra.mxu0 0
      %816 = vmatprep.subr.bf16.mxu0 0
      %817 = vmatpush1.bf16.msra.mxu0 0
      %818 = vmatprep.subr.bf16.mxu0 0
      %819 = vmatpush1.bf16.msra.mxu0 0
      %820 = vmatprep.subr.bf16.mxu0 0
      %821 = vmatpush1.bf16.msra.mxu0 0
      %822 = vmatprep.subr.bf16.mxu0 0
      %823 = vmatpush1.bf16.msra.mxu0 0
      %824 = vmatprep.subr.bf16.mxu0 0
      %825 = vmatpush1.bf16.msra.mxu0 0
      %826 = vmatprep.subr.bf16.mxu0 0
      %827 = vmatpush1.bf16.msra.mxu0 0
      %828 = vmatprep.mubr.bf16.mxu0 0
      %829 = vmatmul.mubr.bf16.gmra.mrb[0].mxu0 %v791
      %v830 = vpop.f32.mrb[0].mxu0
      %v831 = vadd.f32 0.0, %v830
      %v832 = vpop.f32.mrb[0].mxu0
      %v833 = vpop.f32.mrb[0].mxu0
      %v834 = vadd.f32 0.0, %v833
      %v835 = vpop.f32.mrb[0].mxu0
      %836 = vmatprep.mubr.bf16.mxu0 0
      %837 = vmatmul.mubr.bf16.gmra.mrb[0].mxu0 %v794
      %v838 = vpop.f32.mrb[0].mxu0
      %v839 = vadd.f32 0.0, %v838
      %v840 = vpop.f32.mrb[0].mxu0
      %v841 = vpop.f32.mrb[0].mxu0
      %v842 = vadd.f32 0.0, %v841
      %v843 = vpop.f32.mrb[0].mxu0
      %844 = vdwg.mxu0
      %v845 = vrcp.pop %v831
      %v846 = vrcp.pop %v834
      %v847 = vrcp.pop %v839
      %v848 = vrcp.pop %v842
      %850 = vset.pattern.permute.xlu0 32
      %851 = vperm.xlu0 %850, %v845
      %v852 = vpop.permute.xlu0 %851
      %855 = vset.pattern.permute.xlu0 32
      %856 = vperm.xlu0 %855, %v846
      %v857 = vpop.permute.xlu0 %856
      %860 = vset.pattern.permute.xlu0 32
      %861 = vperm.xlu0 %860, %v847
      %v862 = vpop.permute.xlu0 %861
      %865 = vset.pattern.permute.xlu0 32
      %866 = vperm.xlu0 %865, %v848
      %v867 = vpop.permute.xlu0 %866
      %v869 = vmul.f32 %v831, %v852
      %v870 = vmul.f32 %v834, %v857
      %v871 = vmul.f32 %v839, %v862
      %v872 = vmul.f32 %v842, %v867
      %vm873 = vcmp.ge.s32.totalorder %v250, 24
      %vm874 = vcmp.lt.s32.totalorder %v250, 32
      %vm875 = vmand %vm873, %vm874
      %v876 = vsel %vm875, %v869, %v726
      %v877 = vsel %vm875, %v870, %v727
      %v878 = vsel %vm875, %v871, %v728
      %v879 = vsel %vm875, %v872, %v729
      %vm880 = vcmp.gt.f32.partialorder %v876, 0.0
      %vm881 = vcmp.gt.f32.partialorder %v877, 0.0
      %vm882 = vcmp.gt.f32.partialorder %v878, 0.0
      %vm883 = vcmp.gt.f32.partialorder %v879, 0.0
      %v884 = vmin.f32 %v876, 0.0
      %v885 = vmin.f32 %v877, 0.0
      %v886 = vmin.f32 %v878, 0.0
      %v887 = vmin.f32 %v879, 0.0
      %v888 = vmul.f32 %v884, 1.442695
      %v889 = vpow.pop %v888
      %v890 = vmul.f32 %v885, 1.442695
      %v891 = vpow.pop %v890
      %v892 = vmul.f32 %v886, 1.442695
      %v893 = vpow.pop %v892
      %v894 = vmul.f32 %v887, 1.442695
      %v895 = vpow.pop %v894
      %v896 = vsub.f32 %v889, 1.0
      %v897 = vsub.f32 %v891, 1.0
      %v898 = vsub.f32 %v893, 1.0
      %v899 = vsub.f32 %v895, 1.0
      %v900 = vsel %vm880, %v876, %v896
      %v901 = vsel %vm881, %v877, %v897
      %v902 = vsel %vm882, %v878, %v898
      %v903 = vsel %vm883, %v879, %v899
      %v904 = vpack.c.bf16 %v901, %v900
      %v905 = vpack.c.bf16 %v903, %v902
      %v908 = vunpack.c.l.b16 %v904
      %v909 = vunpack.c.h.b16 %v904
      %v910 = vunpack.c.l.b16 %v905
      %v911 = vunpack.c.h.b16 %v905
      %v912 = vpack.c.b16 %v908, %v908
      %v913 = vpack.c.b16 %v909, %v909
      %v914 = vpack.c.b16 %v910, %v910
      %v915 = vpack.c.b16 %v911, %v911
      %920 = vst [vmem:[%s216] sm:$0xf] %v912
      %921 = vst [vmem:[%s216 + $0x4] sm:$0xf] %v913
      %922 = vst [vmem:[%s216 + $0x8] sm:$0xf] %v914
      %923 = vst [vmem:[%s216 + $0xc] sm:$0xf] %v915
      %s924 = smul.u32 4, %s15
      %p925 = scmp.lt.s32.totalorder %s924, 7
      %s926 = scalar_select %p925, %s924, 7
      %s927 = smul.addr %s926, 4
      %s928 = scalar_lea.vmem %s4, %s927
      // Predicated region
      $region37: #{gat_forward.5} parent=35 // pred_check
        %p929 = pneg %p127
      $region38: #{gat_forward.5} parent=35 // pred_check_branch
        %931 = sbr.rel (%p929) target = $region40
      $region39: #{gat_forward.5} parent=35 // pred_region
        %s932 = smul.u32 4, %s15
      $region40: #{gat_forward.5} parent=35 // pred_fallthru
        _
    $region36: #{gat_forward.5} parent=5 // pred_fallthru
      _
    %p933 = scmp.le.s32.totalorder 2, %s10
    // Predicated region
    $region41: #{gat_forward.5} parent=5 // pred_check
      %p934 = pneg %p933
    $region42: #{gat_forward.5} parent=5 // pred_check_branch
      %936 = sbr.rel (%p934) target = $region44
    $region43: #{gat_forward.5} parent=5 // pred_region
      %s937 = ssub.s32 %s10, 2
      // Predicated region
      $region45: #{gat_forward.5} parent=43 // pred_check
        %p938 = pneg %p133
      $region46: #{gat_forward.5} parent=43 // pred_check_branch
        %940 = sbr.rel (%p938) target = $region48
      $region47: #{gat_forward.5} parent=43 // pred_region
        %s941 = smul.u32 4, %s16
        %p942 = scmp.lt.s32.totalorder %s941, 7
        %s943 = scalar_select %p942, %s941, 7
        %s944 = smul.addr %s943, 4
        %s945 = scalar_lea.vmem %s4, %s944
      $region48: #{gat_forward.5} parent=43 // pred_fallthru
        _
    $region44: #{gat_forward.5} parent=5 // pred_fallthru
      _
  $region6: #{gat_forward.5} parent=0 // loop_footer
    %s14 = sadd.s32 1, %s10
  $region7: #{gat_forward.5} parent=0 // loop_footer_branch
    %9 = sbr.rel target = $region3
  $region8: #{gat_forward.5} parent=0 // loop_exit
    _

</llo_original>
